<compile_context>
chip_gen: v7x
topology: tpu7x:2x2x1
jax: 0.10.0
libtpu: 0.0.40
codegen_flags: <defaults>
</compile_context>

<pallas_src>
import functools
import math

import jax
import jax.numpy as jnp
from jax.experimental import pallas as pl
from jax.experimental.pallas import tpu as pltpu


def _layer_norm(x, gamma, beta, eps):
    mu = jnp.mean(x, axis=-1, keepdims=True)
    var = jnp.mean((x - mu) ** 2, axis=-1, keepdims=True)
    return (x - mu) * jax.lax.rsqrt(var + eps) * gamma + beta


def _gelu_tanh(x):
    # matches torch.nn.functional.gelu(..., approximate='tanh')
    c = math.sqrt(2.0 / math.pi)
    return 0.5 * x * (1.0 + jnp.tanh(c * (x + 0.044715 * x * x * x)))


def siglip_encoder_layer_kernel(
    x_ref,
    ln1_w_ref, ln1_b_ref,
    qkv_w_ref, qkv_b_ref,
    o_w_ref, o_b_ref,
    ln2_w_ref, ln2_b_ref,
    fc1_w_ref, fc1_b_ref,
    fc2_w_ref, fc2_b_ref,
    out_ref,
    *, num_heads, head_dim, eps, scale,
):
    D = num_heads * head_dim
    x = x_ref[...]                                    # (S, D) float32
    S = x.shape[0]

    # ---- LayerNorm 1 (f32) ----
    h = _layer_norm(x, ln1_w_ref[...], ln1_b_ref[...], eps)

    # ---- Fused QKV projection: bf16 operands, f32 accumulation ----
    qkv = jnp.dot(h.astype(jnp.bfloat16), qkv_w_ref[...],
                  preferred_element_type=jnp.float32) + qkv_b_ref[...]

    # Scale Q in f32, then cast all attention operands to bf16 for the MXU.
    q = (qkv[:, :D] * scale).astype(jnp.bfloat16)
    k = qkv[:, D:2 * D].astype(jnp.bfloat16)
    v = qkv[:, 2 * D:].astype(jnp.bfloat16)

    def split_heads(t):                               # (S, D) -> (H, S, hd)
        return jnp.swapaxes(t.reshape(S, num_heads, head_dim), 0, 1)

    q = split_heads(q)
    k = split_heads(k)
    v = split_heads(v)

    # ---- Attention: bf16 MXU matmuls, f32 softmax ----
    s = jnp.einsum('hqd,hkd->hqk', q, k,
                   preferred_element_type=jnp.float32)           # (H, S, S) f32
    s = s - jnp.max(s, axis=-1, keepdims=True)
    p = jnp.exp(s)
    p = p * pl.reciprocal(jnp.sum(p, axis=-1, keepdims=True), approx=True)
    # attention dropout p=0.0 -> identity
    ctx = jnp.einsum('hqk,hkd->hqd', p.astype(jnp.bfloat16), v,
                     preferred_element_type=jnp.float32)         # (H, S, hd)
    ctx = jnp.swapaxes(ctx, 0, 1).reshape(S, D)

    attn = jnp.dot(ctx.astype(jnp.bfloat16), o_w_ref[...],
                   preferred_element_type=jnp.float32) + o_b_ref[...]

    # ---- residual 1 ----
    h1 = x + attn

    # ---- LayerNorm 2 + MLP (bf16 matmul operands, f32 elementwise) ----
    h2 = _layer_norm(h1, ln2_w_ref[...], ln2_b_ref[...], eps)
    m = jnp.dot(h2.astype(jnp.bfloat16), fc1_w_ref[...],
                preferred_element_type=jnp.float32) + fc1_b_ref[...]
    m = _gelu_tanh(m)
    m = jnp.dot(m.astype(jnp.bfloat16), fc2_w_ref[...],
                preferred_element_type=jnp.float32) + fc2_b_ref[...]

    # ---- residual 2 ----
    out_ref[...] = h1 + m


def prepare_siglip_params(params):
    """One-time parameter prep: QKV fusion + bf16 casts of matmul weights.

    Hoisted out of the per-call path so the concat/cast HBM traffic is not on
    the forward critical path.
    """
    bf16 = lambda w: w.astype(jnp.bfloat16)
    return {
        "ln1_w": params["ln1_w"], "ln1_b": params["ln1_b"],
        "ln2_w": params["ln2_w"], "ln2_b": params["ln2_b"],
        "qkv_w": bf16(jnp.concatenate(
            [params["q_w"], params["k_w"], params["v_w"]], axis=1)),
        "qkv_b": jnp.concatenate(
            [params["q_b"], params["k_b"], params["v_b"]], axis=1),
        "o_w": bf16(params["o_w"]), "o_b": params["o_b"],
        "fc1_w": bf16(params["fc1_w"]), "fc1_b": params["fc1_b"],
        "fc2_w": bf16(params["fc2_w"]), "fc2_b": params["fc2_b"],
    }


def siglip_encoder_layer(x, prepared, *, num_heads, eps):
    B, S, D = x.shape
    head_dim = D // num_heads
    scale = head_dim ** (-0.5)
    inter = prepared["fc1_w"].shape[1]

    kernel = functools.partial(
        siglip_encoder_layer_kernel,
        num_heads=num_heads, head_dim=head_dim, eps=eps, scale=scale)

    const = lambda shape: pl.BlockSpec(shape, lambda b: (0,) * len(shape))

    in_specs = [
        # Activation slab: one batch element per grid step (leading dim squeezed).
        pl.BlockSpec((None, S, D), lambda b: (b, 0, 0)),
        # Weights: constant index_maps -> resident across grid steps.
        const((1, D)), const((1, D)),                     # ln1 w, b
        const((D, 3 * D)), const((1, 3 * D)),             # qkv w, b
        const((D, D)), const((1, D)),                     # o   w, b
        const((1, D)), const((1, D)),                     # ln2 w, b
        const((D, inter)), const((1, inter)),             # fc1 w, b
        const((inter, D)), const((1, D)),                 # fc2 w, b
    ]
    out_spec = pl.BlockSpec((None, S, D), lambda b: (b, 0, 0))

    return pl.pallas_call(
        kernel,
        out_shape=jax.ShapeDtypeStruct((B, S, D), x.dtype),
        grid=(B,),
        in_specs=in_specs,
        out_specs=out_spec,
        compiler_params=pltpu.CompilerParams(
            dimension_semantics=("parallel",),
            vmem_limit_bytes=64 * 1024 * 1024),
    )(
        x,
        prepared["ln1_w"], prepared["ln1_b"],
        prepared["qkv_w"], prepared["qkv_b"],
        prepared["o_w"], prepared["o_b"],
        prepared["ln2_w"], prepared["ln2_b"],
        prepared["fc1_w"], prepared["fc1_b"],
        prepared["fc2_w"], prepared["fc2_b"],
    )


def _reference(x, params, *, num_heads, eps):
    """Pure-JAX f32 reference mirroring the PyTorch forward, for verification."""
    B, S, D = x.shape
    hd = D // num_heads
    scale = hd ** (-0.5)

    def ln(v, g, b):
        mu = jnp.mean(v, axis=-1, keepdims=True)
        var = jnp.mean((v - mu) ** 2, axis=-1, keepdims=True)
        return (v - mu) / jnp.sqrt(var + eps) * g + b

    h = ln(x, params["ln1_w"], params["ln1_b"])
    q = h @ params["q_w"] + params["q_b"]
    k = h @ params["k_w"] + params["k_b"]
    v = h @ params["v_w"] + params["v_b"]
    q = q.reshape(B, S, num_heads, hd).transpose(0, 2, 1, 3)
    k = k.reshape(B, S, num_heads, hd).transpose(0, 2, 1, 3)
    v = v.reshape(B, S, num_heads, hd).transpose(0, 2, 1, 3)
    w = jnp.einsum("bhqd,bhkd->bhqk", q, k) * scale
    w = jax.nn.softmax(w, axis=-1)
    o = jnp.einsum("bhqk,bhkd->bhqd", w, v)
    o = o.transpose(0, 2, 1, 3).reshape(B, S, D)
    o = o @ params["o_w"] + params["o_b"]
    h1 = x + o
    h2 = ln(h1, params["ln2_w"], params["ln2_b"])
    m = h2 @ params["fc1_w"] + params["fc1_b"]
    m = _gelu_tanh(m)
    m = m @ params["fc2_w"] + params["fc2_b"]
    return h1 + m


if __name__ == "__main__":
    # Small config consistent with SiglipVisionConfig semantics, but with a
    # lane-dense hidden size (D multiple of 128) and a realistic head_dim so
    # output stores are unmasked and vregs are not mostly empty.
    B, S, D = 2, 16, 128         # batch, seq (num image tokens), hidden_size
    num_heads = 2                # head_dim = 64 (real Siglip head_dim range)
    intermediate = 4 * D
    eps = 1e-6

    key = jax.random.PRNGKey(0)
    ks = jax.random.split(key, 13)

    def nrm(k, shape, scale=0.02):
        return jax.random.normal(k, shape, dtype=jnp.float32) * scale

    params = {
        # LayerNorm params as (1, D) rows for clean 2-D VMEM layout.
        "ln1_w": jnp.ones((1, D), jnp.float32),
        "ln1_b": jnp.zeros((1, D), jnp.float32),
        "ln2_w": jnp.ones((1, D), jnp.float32),
        "ln2_b": jnp.zeros((1, D), jnp.float32),
        # Linear weights stored (in, out) == W.T of the PyTorch (out, in) layout.
        "q_w": nrm(ks[0], (D, D)), "q_b": nrm(ks[1], (1, D)),
        "k_w": nrm(ks[2], (D, D)), "k_b": nrm(ks[3], (1, D)),
        "v_w": nrm(ks[4], (D, D)), "v_b": nrm(ks[5], (1, D)),
        "o_w": nrm(ks[6], (D, D)), "o_b": nrm(ks[7], (1, D)),
        "fc1_w": nrm(ks[8], (D, intermediate)), "fc1_b": nrm(ks[9], (1, intermediate)),
        "fc2_w": nrm(ks[10], (intermediate, D)), "fc2_b": nrm(ks[11], (1, D)),
    }

    x = jax.random.normal(ks[12], (B, S, D), dtype=jnp.float32)

    # One-time parameter preparation (QKV fusion + bf16 casts), outside the
    # per-call path.
    prepared = jax.tree_util.tree_map(
        jax.block_until_ready, prepare_siglip_params(params))

    out = siglip_encoder_layer(x, prepared, num_heads=num_heads, eps=eps)
    out = jax.block_until_ready(out)

    ref = _reference(x, params, num_heads=num_heads, eps=eps)
    assert out.shape == (B, S, D)
    # bf16 matmul operands + approx reciprocal in the kernel vs. pure-f32
    # reference -> slightly looser tolerance than a bit-exact f32 kernel.
    assert jnp.allclose(out, ref, atol=2e-2, rtol=2e-2), float(
        jnp.max(jnp.abs(out - ref)))

    print("KERNEL_OK")
</pallas_src>

<mosaic_0001>
module attributes {stable_mosaic.version = 11 : i64} {
  func.func @siglip_encoder_layer_kernel(%arg0: i32, %arg1: memref<1x16x128xf32, #tpu.memory_space<vmem>>, %arg2: memref<1x128xf32, #tpu.memory_space<vmem>>, %arg3: memref<1x128xf32, #tpu.memory_space<vmem>>, %arg4: memref<128x384xbf16, #tpu.memory_space<vmem>>, %arg5: memref<1x384xf32, #tpu.memory_space<vmem>>, %arg6: memref<128x128xbf16, #tpu.memory_space<vmem>>, %arg7: memref<1x128xf32, #tpu.memory_space<vmem>>, %arg8: memref<1x128xf32, #tpu.memory_space<vmem>>, %arg9: memref<1x128xf32, #tpu.memory_space<vmem>>, %arg10: memref<128x512xbf16, #tpu.memory_space<vmem>>, %arg11: memref<1x512xf32, #tpu.memory_space<vmem>>, %arg12: memref<512x128xbf16, #tpu.memory_space<vmem>>, %arg13: memref<1x128xf32, #tpu.memory_space<vmem>>, %arg14: memref<1x16x128xf32, #tpu.memory_space<vmem>>) attributes {dimension_semantics = [#tpu.dimension_semantics<parallel>], iteration_bounds = array<i64: 2>, scalar_prefetch = 0 : i64, scratch_operands = 0 : i64, tpu.core_type = #tpu.core_type<tc>, window_params = [{transform_indices = @transform_0, window_bounds = array<i64: 1, 16, 128>}, {pipeline_mode = #tpu.pipeline_mode<synchronous>, transform_indices = @transform_1, window_bounds = array<i64: 1, 128>}, {pipeline_mode = #tpu.pipeline_mode<synchronous>, transform_indices = @transform_2, window_bounds = array<i64: 1, 128>}, {pipeline_mode = #tpu.pipeline_mode<synchronous>, transform_indices = @transform_3, window_bounds = array<i64: 128, 384>}, {pipeline_mode = #tpu.pipeline_mode<synchronous>, transform_indices = @transform_4, window_bounds = array<i64: 1, 384>}, {pipeline_mode = #tpu.pipeline_mode<synchronous>, transform_indices = @transform_5, window_bounds = array<i64: 128, 128>}, {pipeline_mode = #tpu.pipeline_mode<synchronous>, transform_indices = @transform_6, window_bounds = array<i64: 1, 128>}, {pipeline_mode = #tpu.pipeline_mode<synchronous>, transform_indices = @transform_7, window_bounds = array<i64: 1, 128>}, {pipeline_mode = #tpu.pipeline_mode<synchronous>, transform_indices = @transform_8, window_bounds = array<i64: 1, 128>}, {pipeline_mode = #tpu.pipeline_mode<synchronous>, transform_indices = @transform_9, window_bounds = array<i64: 128, 512>}, {pipeline_mode = #tpu.pipeline_mode<synchronous>, transform_indices = @transform_10, window_bounds = array<i64: 1, 512>}, {pipeline_mode = #tpu.pipeline_mode<synchronous>, transform_indices = @transform_11, window_bounds = array<i64: 512, 128>}, {pipeline_mode = #tpu.pipeline_mode<synchronous>, transform_indices = @transform_12, window_bounds = array<i64: 1, 128>}, {transform_indices = @transform_13, window_bounds = array<i64: 1, 16, 128>}]} {
    %c0 = arith.constant 0 : index
    %c0_0 = arith.constant 0 : index
    %c0_1 = arith.constant 0 : index
    %0 = vector.load %arg1[%c0, %c0_0, %c0_1] : memref<1x16x128xf32, #tpu.memory_space<vmem>>, vector<1x16x128xf32>
    %1 = vector.shape_cast %0 : vector<1x16x128xf32> to vector<16x128xf32>
    %c0_2 = arith.constant 0 : index
    %c0_3 = arith.constant 0 : index
    %2 = vector.load %arg2[%c0_2, %c0_3] : memref<1x128xf32, #tpu.memory_space<vmem>>, vector<1x128xf32>
    %c0_4 = arith.constant 0 : index
    %c0_5 = arith.constant 0 : index
    %3 = vector.load %arg3[%c0_4, %c0_5] : memref<1x128xf32, #tpu.memory_space<vmem>>, vector<1x128xf32>
    %cst = arith.constant dense<0.000000e+00> : vector<16xf32>
    %4 = vector.multi_reduction <add>, %1, %cst [1] : vector<16x128xf32> to vector<16xf32>
    %5 = vector.shape_cast %4 : vector<16xf32> to vector<16x1xf32>
    %cst_6 = arith.constant 1.280000e+02 : f32
    %6 = vector.broadcast %cst_6 : f32 to vector<16x1xf32>
    %7 = arith.divf %5, %6 : vector<16x1xf32>
    %8 = vector.broadcast %7 : vector<16x1xf32> to vector<16x128xf32>
    %9 = arith.subf %1, %8 : vector<16x128xf32>
    %10 = arith.mulf %9, %9 : vector<16x128xf32>
    %cst_7 = arith.constant dense<0.000000e+00> : vector<16xf32>
    %11 = vector.multi_reduction <add>, %10, %cst_7 [1] : vector<16x128xf32> to vector<16xf32>
    %12 = vector.shape_cast %11 : vector<16xf32> to vector<16x1xf32>
    %cst_8 = arith.constant 1.280000e+02 : f32
    %13 = vector.broadcast %cst_8 : f32 to vector<16x1xf32>
    %14 = arith.divf %12, %13 : vector<16x1xf32>
    %15 = vector.broadcast %7 : vector<16x1xf32> to vector<16x128xf32>
    %16 = arith.subf %1, %15 : vector<16x128xf32>
    %cst_9 = arith.constant 9.99999997E-7 : f32
    %17 = vector.broadcast %cst_9 : f32 to vector<16x1xf32>
    %18 = arith.addf %14, %17 : vector<16x1xf32>
    %19 = math.rsqrt %18 : vector<16x1xf32>
    %20 = vector.broadcast %19 : vector<16x1xf32> to vector<16x128xf32>
    %21 = arith.mulf %16, %20 : vector<16x128xf32>
    %22 = vector.broadcast %2 : vector<1x128xf32> to vector<16x128xf32>
    %23 = arith.mulf %21, %22 : vector<16x128xf32>
    %24 = vector.broadcast %3 : vector<1x128xf32> to vector<16x128xf32>
    %25 = arith.addf %23, %24 : vector<16x128xf32>
    %26 = arith.truncf %25 : vector<16x128xf32> to vector<16x128xbf16>
    %c0_10 = arith.constant 0 : index
    %c0_11 = arith.constant 0 : index
    %27 = vector.load %arg4[%c0_10, %c0_11] : memref<128x384xbf16, #tpu.memory_space<vmem>>, vector<128x384xbf16>
    %cst_12 = arith.constant dense<0.000000e+00> : vector<16x384xf32>
    %28 = tpu.matmul %26, %27, %cst_12 {dimension_numbers = #tpu.dot_dimension_numbers<[1], [0], [0], [1], [0, 0, 1, 1], [], []>} : vector<16x128xbf16>, vector<128x384xbf16>, vector<16x384xf32> -> vector<16x384xf32>
    %c0_13 = arith.constant 0 : index
    %c0_14 = arith.constant 0 : index
    %29 = vector.load %arg5[%c0_13, %c0_14] : memref<1x384xf32, #tpu.memory_space<vmem>>, vector<1x384xf32>
    %30 = vector.broadcast %29 : vector<1x384xf32> to vector<16x384xf32>
    %31 = arith.addf %28, %30 : vector<16x384xf32>
    %32 = vector.extract_strided_slice %31 {offsets = [0, 0], sizes = [16, 128], strides = [1, 1]} : vector<16x384xf32> to vector<16x128xf32>
    %cst_15 = arith.constant 1.250000e-01 : f32
    %33 = vector.broadcast %cst_15 : f32 to vector<16x128xf32>
    %34 = arith.mulf %32, %33 : vector<16x128xf32>
    %35 = arith.truncf %34 : vector<16x128xf32> to vector<16x128xbf16>
    %36 = vector.extract_strided_slice %31 {offsets = [0, 128], sizes = [16, 128], strides = [1, 1]} : vector<16x384xf32> to vector<16x128xf32>
    %37 = arith.truncf %36 : vector<16x128xf32> to vector<16x128xbf16>
    %38 = vector.extract_strided_slice %31 {offsets = [0, 256], sizes = [16, 128], strides = [1, 1]} : vector<16x384xf32> to vector<16x128xf32>
    %39 = arith.truncf %38 : vector<16x128xf32> to vector<16x128xbf16>
    %40 = vector.shape_cast %35 : vector<16x128xbf16> to vector<16x2x64xbf16>
    %41 = tpu.transpose %40, [1, 0, 2] : vector<16x2x64xbf16> -> vector<2x16x64xbf16>
    %42 = vector.shape_cast %37 : vector<16x128xbf16> to vector<16x2x64xbf16>
    %43 = tpu.transpose %42, [1, 0, 2] : vector<16x2x64xbf16> -> vector<2x16x64xbf16>
    %44 = vector.shape_cast %39 : vector<16x128xbf16> to vector<16x2x64xbf16>
    %45 = tpu.transpose %44, [1, 0, 2] : vector<16x2x64xbf16> -> vector<2x16x64xbf16>
    "tpu.trace_start"() <{level = 10 : i32, message = "hqd,hkd->hqk"}> : () -> ()
    %cst_16 = arith.constant dense<0.000000e+00> : vector<2x16x16xf32>
    %46 = tpu.matmul %41, %43, %cst_16 {dimension_numbers = #tpu.dot_dimension_numbers<[2], [2], [1], [1], [0, 0, 0, 1, 1, 1], [0], [0]>} : vector<2x16x64xbf16>, vector<2x16x64xbf16>, vector<2x16x16xf32> -> vector<2x16x16xf32>
    "tpu.trace_stop"() : () -> ()
    %cst_17 = arith.constant dense<0xFF800000> : vector<2x16xf32>
    %47 = vector.multi_reduction <maximumf>, %46, %cst_17 [2] : vector<2x16x16xf32> to vector<2x16xf32>
    %48 = vector.shape_cast %47 : vector<2x16xf32> to vector<2x16x1xf32>
    %49 = vector.broadcast %48 : vector<2x16x1xf32> to vector<2x16x16xf32>
    %50 = arith.subf %46, %49 : vector<2x16x16xf32>
    %51 = math.exp %50 : vector<2x16x16xf32>
    %cst_18 = arith.constant dense<0.000000e+00> : vector<2x16xf32>
    %52 = vector.multi_reduction <add>, %51, %cst_18 [2] : vector<2x16x16xf32> to vector<2x16xf32>
    %53 = vector.shape_cast %52 : vector<2x16xf32> to vector<2x16x1xf32>
    %54 = tpu.reciprocal %53 {approx = true} : vector<2x16x1xf32> -> vector<2x16x1xf32>
    %55 = vector.broadcast %54 : vector<2x16x1xf32> to vector<2x16x16xf32>
    %56 = arith.mulf %51, %55 : vector<2x16x16xf32>
    %57 = arith.truncf %56 : vector<2x16x16xf32> to vector<2x16x16xbf16>
    "tpu.trace_start"() <{level = 10 : i32, message = "hqk,hkd->hqd"}> : () -> ()
    %cst_19 = arith.constant dense<0.000000e+00> : vector<2x16x64xf32>
    %58 = tpu.matmul %57, %45, %cst_19 {dimension_numbers = #tpu.dot_dimension_numbers<[2], [1], [1], [2], [0, 0, 0, 1, 1, 2], [0], [0]>} : vector<2x16x16xbf16>, vector<2x16x64xbf16>, vector<2x16x64xf32> -> vector<2x16x64xf32>
    "tpu.trace_stop"() : () -> ()
    %59 = tpu.transpose %58, [1, 0, 2] : vector<2x16x64xf32> -> vector<16x2x64xf32>
    %60 = vector.shape_cast %59 : vector<16x2x64xf32> to vector<16x128xf32>
    %61 = arith.truncf %60 : vector<16x128xf32> to vector<16x128xbf16>
    %c0_20 = arith.constant 0 : index
    %c0_21 = arith.constant 0 : index
    %62 = vector.load %arg6[%c0_20, %c0_21] : memref<128x128xbf16, #tpu.memory_space<vmem>>, vector<128x128xbf16>
    %cst_22 = arith.constant dense<0.000000e+00> : vector<16x128xf32>
    %63 = tpu.matmul %61, %62, %cst_22 {dimension_numbers = #tpu.dot_dimension_numbers<[1], [0], [0], [1], [0, 0, 1, 1], [], []>} : vector<16x128xbf16>, vector<128x128xbf16>, vector<16x128xf32> -> vector<16x128xf32>
    %c0_23 = arith.constant 0 : index
    %c0_24 = arith.constant 0 : index
    %64 = vector.load %arg7[%c0_23, %c0_24] : memref<1x128xf32, #tpu.memory_space<vmem>>, vector<1x128xf32>
    %65 = vector.broadcast %64 : vector<1x128xf32> to vector<16x128xf32>
    %66 = arith.addf %63, %65 : vector<16x128xf32>
    %67 = arith.addf %1, %66 : vector<16x128xf32>
    %c0_25 = arith.constant 0 : index
    %c0_26 = arith.constant 0 : index
    %68 = vector.load %arg8[%c0_25, %c0_26] : memref<1x128xf32, #tpu.memory_space<vmem>>, vector<1x128xf32>
    %c0_27 = arith.constant 0 : index
    %c0_28 = arith.constant 0 : index
    %69 = vector.load %arg9[%c0_27, %c0_28] : memref<1x128xf32, #tpu.memory_space<vmem>>, vector<1x128xf32>
    %cst_29 = arith.constant dense<0.000000e+00> : vector<16xf32>
    %70 = vector.multi_reduction <add>, %67, %cst_29 [1] : vector<16x128xf32> to vector<16xf32>
    %71 = vector.shape_cast %70 : vector<16xf32> to vector<16x1xf32>
    %cst_30 = arith.constant 1.280000e+02 : f32
    %72 = vector.broadcast %cst_30 : f32 to vector<16x1xf32>
    %73 = arith.divf %71, %72 : vector<16x1xf32>
    %74 = vector.broadcast %73 : vector<16x1xf32> to vector<16x128xf32>
    %75 = arith.subf %67, %74 : vector<16x128xf32>
    %76 = arith.mulf %75, %75 : vector<16x128xf32>
    %cst_31 = arith.constant dense<0.000000e+00> : vector<16xf32>
    %77 = vector.multi_reduction <add>, %76, %cst_31 [1] : vector<16x128xf32> to vector<16xf32>
    %78 = vector.shape_cast %77 : vector<16xf32> to vector<16x1xf32>
    %cst_32 = arith.constant 1.280000e+02 : f32
    %79 = vector.broadcast %cst_32 : f32 to vector<16x1xf32>
    %80 = arith.divf %78, %79 : vector<16x1xf32>
    %81 = vector.broadcast %73 : vector<16x1xf32> to vector<16x128xf32>
    %82 = arith.subf %67, %81 : vector<16x128xf32>
    %cst_33 = arith.constant 9.99999997E-7 : f32
    %83 = vector.broadcast %cst_33 : f32 to vector<16x1xf32>
    %84 = arith.addf %80, %83 : vector<16x1xf32>
    %85 = math.rsqrt %84 : vector<16x1xf32>
    %86 = vector.broadcast %85 : vector<16x1xf32> to vector<16x128xf32>
    %87 = arith.mulf %82, %86 : vector<16x128xf32>
    %88 = vector.broadcast %68 : vector<1x128xf32> to vector<16x128xf32>
    %89 = arith.mulf %87, %88 : vector<16x128xf32>
    %90 = vector.broadcast %69 : vector<1x128xf32> to vector<16x128xf32>
    %91 = arith.addf %89, %90 : vector<16x128xf32>
    %92 = arith.truncf %91 : vector<16x128xf32> to vector<16x128xbf16>
    %c0_34 = arith.constant 0 : index
    %c0_35 = arith.constant 0 : index
    %93 = vector.load %arg10[%c0_34, %c0_35] : memref<128x512xbf16, #tpu.memory_space<vmem>>, vector<128x512xbf16>
    %cst_36 = arith.constant dense<0.000000e+00> : vector<16x512xf32>
    %94 = tpu.matmul %92, %93, %cst_36 {dimension_numbers = #tpu.dot_dimension_numbers<[1], [0], [0], [1], [0, 0, 1, 1], [], []>} : vector<16x128xbf16>, vector<128x512xbf16>, vector<16x512xf32> -> vector<16x512xf32>
    %c0_37 = arith.constant 0 : index
    %c0_38 = arith.constant 0 : index
    %95 = vector.load %arg11[%c0_37, %c0_38] : memref<1x512xf32, #tpu.memory_space<vmem>>, vector<1x512xf32>
    %96 = vector.broadcast %95 : vector<1x512xf32> to vector<16x512xf32>
    %97 = arith.addf %94, %96 : vector<16x512xf32>
    %cst_39 = arith.constant 5.000000e-01 : f32
    %98 = vector.broadcast %cst_39 : f32 to vector<16x512xf32>
    %99 = arith.mulf %98, %97 : vector<16x512xf32>
    %cst_40 = arith.constant 4.471500e-02 : f32
    %100 = vector.broadcast %cst_40 : f32 to vector<16x512xf32>
    %101 = arith.mulf %100, %97 : vector<16x512xf32>
    %102 = arith.mulf %101, %97 : vector<16x512xf32>
    %103 = arith.mulf %102, %97 : vector<16x512xf32>
    %104 = arith.addf %97, %103 : vector<16x512xf32>
    %cst_41 = arith.constant 0.797884583 : f32
    %105 = vector.broadcast %cst_41 : f32 to vector<16x512xf32>
    %106 = arith.mulf %105, %104 : vector<16x512xf32>
    %107 = math.tanh %106 : vector<16x512xf32>
    %cst_42 = arith.constant 1.000000e+00 : f32
    %108 = vector.broadcast %cst_42 : f32 to vector<16x512xf32>
    %109 = arith.addf %108, %107 : vector<16x512xf32>
    %110 = arith.mulf %99, %109 : vector<16x512xf32>
    %111 = arith.truncf %110 : vector<16x512xf32> to vector<16x512xbf16>
    %c0_43 = arith.constant 0 : index
    %c0_44 = arith.constant 0 : index
    %112 = vector.load %arg12[%c0_43, %c0_44] : memref<512x128xbf16, #tpu.memory_space<vmem>>, vector<512x128xbf16>
    %cst_45 = arith.constant dense<0.000000e+00> : vector<16x128xf32>
    %113 = tpu.matmul %111, %112, %cst_45 {dimension_numbers = #tpu.dot_dimension_numbers<[1], [0], [0], [1], [0, 0, 1, 1], [], []>} : vector<16x512xbf16>, vector<512x128xbf16>, vector<16x128xf32> -> vector<16x128xf32>
    %c0_46 = arith.constant 0 : index
    %c0_47 = arith.constant 0 : index
    %114 = vector.load %arg13[%c0_46, %c0_47] : memref<1x128xf32, #tpu.memory_space<vmem>>, vector<1x128xf32>
    %115 = vector.broadcast %114 : vector<1x128xf32> to vector<16x128xf32>
    %116 = arith.addf %113, %115 : vector<16x128xf32>
    %117 = arith.addf %67, %116 : vector<16x128xf32>
    %c0_48 = arith.constant 0 : index
    %c0_49 = arith.constant 0 : index
    %c0_50 = arith.constant 0 : index
    %118 = vector.load %arg14[%c0_48, %c0_49, %c0_50] : memref<1x16x128xf32, #tpu.memory_space<vmem>>, vector<1x16x128xf32>
    %119 = vector.shape_cast %118 : vector<1x16x128xf32> to vector<16x128xf32>
    %120 = vector.shape_cast %117 : vector<16x128xf32> to vector<1x16x128xf32>
    tpu.vector_store %arg14[%c0_48, %c0_49, %c0_50], %120 {strides = array<i32>} : memref<1x16x128xf32, #tpu.memory_space<vmem>>, vector<1x16x128xf32>,
    return
  }
  func.func @transform_0(%arg0: i32) -> (i32, i32, i32) {
    %c0_i32 = arith.constant 0 : i32
    %c0_i32_0 = arith.constant 0 : i32
    %c0_i32_1 = arith.constant 0 : i32
    return %arg0, %c0_i32, %c0_i32_0 : i32, i32, i32
  }
  func.func @transform_1(%arg0: i32) -> (i32, i32) {
    %c0_i32 = arith.constant 0 : i32
    %c0_i32_0 = arith.constant 0 : i32
    %c0_i32_1 = arith.constant 0 : i32
    return %c0_i32, %c0_i32_0 : i32, i32
  }
  func.func @transform_2(%arg0: i32) -> (i32, i32) {
    %c0_i32 = arith.constant 0 : i32
    %c0_i32_0 = arith.constant 0 : i32
    %c0_i32_1 = arith.constant 0 : i32
    return %c0_i32, %c0_i32_0 : i32, i32
  }
  func.func @transform_3(%arg0: i32) -> (i32, i32) {
    %c0_i32 = arith.constant 0 : i32
    %c0_i32_0 = arith.constant 0 : i32
    %c0_i32_1 = arith.constant 0 : i32
    return %c0_i32, %c0_i32_0 : i32, i32
  }
  func.func @transform_4(%arg0: i32) -> (i32, i32) {
    %c0_i32 = arith.constant 0 : i32
    %c0_i32_0 = arith.constant 0 : i32
    %c0_i32_1 = arith.constant 0 : i32
    return %c0_i32, %c0_i32_0 : i32, i32
  }
  func.func @transform_5(%arg0: i32) -> (i32, i32) {
    %c0_i32 = arith.constant 0 : i32
    %c0_i32_0 = arith.constant 0 : i32
    %c0_i32_1 = arith.constant 0 : i32
    return %c0_i32, %c0_i32_0 : i32, i32
  }
  func.func @transform_6(%arg0: i32) -> (i32, i32) {
    %c0_i32 = arith.constant 0 : i32
    %c0_i32_0 = arith.constant 0 : i32
    %c0_i32_1 = arith.constant 0 : i32
    return %c0_i32, %c0_i32_0 : i32, i32
  }
  func.func @transform_7(%arg0: i32) -> (i32, i32) {
    %c0_i32 = arith.constant 0 : i32
    %c0_i32_0 = arith.constant 0 : i32
    %c0_i32_1 = arith.constant 0 : i32
    return %c0_i32, %c0_i32_0 : i32, i32
  }
  func.func @transform_8(%arg0: i32) -> (i32, i32) {
    %c0_i32 = arith.constant 0 : i32
    %c0_i32_0 = arith.constant 0 : i32
    %c0_i32_1 = arith.constant 0 : i32
    return %c0_i32, %c0_i32_0 : i32, i32
  }
  func.func @transform_9(%arg0: i32) -> (i32, i32) {
    %c0_i32 = arith.constant 0 : i32
    %c0_i32_0 = arith.constant 0 : i32
    %c0_i32_1 = arith.constant 0 : i32
    return %c0_i32, %c0_i32_0 : i32, i32
  }
  func.func @transform_10(%arg0: i32) -> (i32, i32) {
    %c0_i32 = arith.constant 0 : i32
    %c0_i32_0 = arith.constant 0 : i32
    %c0_i32_1 = arith.constant 0 : i32
    return %c0_i32, %c0_i32_0 : i32, i32
  }
  func.func @transform_11(%arg0: i32) -> (i32, i32) {
    %c0_i32 = arith.constant 0 : i32
    %c0_i32_0 = arith.constant 0 : i32
    %c0_i32_1 = arith.constant 0 : i32
    return %c0_i32, %c0_i32_0 : i32, i32
  }
  func.func @transform_12(%arg0: i32) -> (i32, i32) {
    %c0_i32 = arith.constant 0 : i32
    %c0_i32_0 = arith.constant 0 : i32
    %c0_i32_1 = arith.constant 0 : i32
    return %c0_i32, %c0_i32_0 : i32, i32
  }
  func.func @transform_13(%arg0: i32) -> (i32, i32, i32) {
    %c0_i32 = arith.constant 0 : i32
    %c0_i32_0 = arith.constant 0 : i32
    %c0_i32_1 = arith.constant 0 : i32
    return %arg0, %c0_i32, %c0_i32_0 : i32, i32, i32
  }
}

</mosaic_0001>

<llo_original>
// kernel: tpu_custom_call.1
$region0: #{tpu_custom_call.1}
  #allocation0 [shape = 'u32[]', space=smem, size = 0x4, offset = 0x4, fixed_abs, tag = 'smem constant byte address 0x4 - core index']
  #allocation1 [shape = 'u32[144,128]{1,0:T(1,128)}', space=vmem, size = 0x12000, scoped, tag = 'internal scratch']
  %s0 = inlined_call_operand.hbm [shape: f32[2,16,128], index: 0, kind: input, shape index: {}]
  %s1 = inlined_call_operand.hbm [shape: f32[1,128], index: 1, kind: input, shape index: {}]
  %s2 = inlined_call_operand.hbm [shape: f32[1,128], index: 2, kind: input, shape index: {}]
  %s3 = inlined_call_operand.hbm [shape: bf16[128,384], index: 3, kind: input, shape index: {}]
  %s4 = inlined_call_operand.hbm [shape: f32[1,384], index: 4, kind: input, shape index: {}]
  %s5 = inlined_call_operand.hbm [shape: bf16[128,128], index: 5, kind: input, shape index: {}]
  %s6 = inlined_call_operand.hbm [shape: f32[1,128], index: 6, kind: input, shape index: {}]
  %s7 = inlined_call_operand.hbm [shape: f32[1,128], index: 7, kind: input, shape index: {}]
  %s8 = inlined_call_operand.hbm [shape: f32[1,128], index: 8, kind: input, shape index: {}]
  %s9 = inlined_call_operand.hbm [shape: bf16[128,512], index: 9, kind: input, shape index: {}]
  %s10 = inlined_call_operand.hbm [shape: f32[1,512], index: 10, kind: input, shape index: {}]
  %s11 = inlined_call_operand.hbm [shape: bf16[512,128], index: 11, kind: input, shape index: {}]
  %s12 = inlined_call_operand.hbm [shape: f32[1,128], index: 12, kind: input, shape index: {}]
  %s13 = inlined_call_operand.hbm [shape: f32[2,16,128], index: 13, kind: output, shape index: {}]
  %s14 = sld [smem:[#allocation0]]
  $region137: #{tpu_custom_call.1} parent=0
    _
  %s16 = ssub.s32 1, %s14
  %s17 = scalar_select 0, %s16, %s14
  $region1: #{tpu_custom_call.1} parent=0
    #allocation2 [shape = 'u8[16384]{0}', space=vmem, size = 0x4000, scoped, tag = 'input window, operand 0']
    #allocation3 [shape = 's32[2]{0}', space=sflag, size = 0x8, scoped, tag = 'scoped memory for tpu_custom_call.1']
    #allocation4 [shape = 's32[2]{0}', space=sflag, size = 0x8, scoped, tag = 'scoped memory for tpu_custom_call.1']
    #allocation5 [shape = 'u8[512]{0}', space=vmem, size = 0x400, scoped, tag = 'input window, operand 1, single buffered']
    #allocation6 [shape = 's32[1]{0}', space=sflag, size = 0x4, scoped, tag = 'scoped memory for tpu_custom_call.1']
    #allocation7 [shape = 'u8[512]{0}', space=vmem, size = 0x400, scoped, tag = 'input window, operand 2, single buffered']
    #allocation8 [shape = 'u8[98304]{0}', space=vmem, size = 0x18000, scoped, tag = 'input window, operand 3, single buffered']
    #allocation9 [shape = 's32[1]{0}', space=sflag, size = 0x4, scoped, tag = 'scoped memory for tpu_custom_call.1']
    #allocation10 [shape = 'u8[1536]{0}', space=vmem, size = 0x800, scoped, tag = 'input window, operand 4, single buffered']
    #allocation11 [shape = 'u8[32768]{0}', space=vmem, size = 0x8000, scoped, tag = 'input window, operand 5, single buffered']
    #allocation12 [shape = 's32[1]{0}', space=sflag, size = 0x4, scoped, tag = 'scoped memory for tpu_custom_call.1']
    #allocation13 [shape = 'u8[512]{0}', space=vmem, size = 0x400, scoped, tag = 'input window, operand 6, single buffered']
    #allocation14 [shape = 'u8[512]{0}', space=vmem, size = 0x400, scoped, tag = 'input window, operand 7, single buffered']
    #allocation15 [shape = 's32[1]{0}', space=sflag, size = 0x4, scoped, tag = 'scoped memory for tpu_custom_call.1']
    #allocation16 [shape = 'u8[512]{0}', space=vmem, size = 0x400, scoped, tag = 'input window, operand 8, single buffered']
    #allocation17 [shape = 'u8[131072]{0}', space=vmem, size = 0x20000, scoped, tag = 'input window, operand 9, single buffered']
    #allocation18 [shape = 's32[1]{0}', space=sflag, size = 0x4, scoped, tag = 'scoped memory for tpu_custom_call.1']
    #allocation19 [shape = 'u8[2048]{0}', space=vmem, size = 0x800, scoped, tag = 'input window, operand 10, single buffered']
    #allocation20 [shape = 'u8[131072]{0}', space=vmem, size = 0x20000, scoped, tag = 'input window, operand 11, single buffered']
    #allocation21 [shape = 's32[1]{0}', space=sflag, size = 0x4, scoped, tag = 'scoped memory for tpu_custom_call.1']
    #allocation22 [shape = 'u8[512]{0}', space=vmem, size = 0x400, scoped, tag = 'input window, operand 12, single buffered']
    #allocation23 [shape = 'u8[16384]{0}', space=vmem, size = 0x4000, scoped, tag = 'output window, operand 0']
    %18 = vsyncpa [#allocation3], 0
    %s19 = scalar_lea.sflag [#allocation3], 1
    %20 = vsyncpa %s19, 0
    %21 = vsyncpa [#allocation6], 0
    %22 = vsyncpa [#allocation9], 0
    %23 = vsyncpa [#allocation12], 0
    %24 = vsyncpa [#allocation15], 0
    %25 = vsyncpa [#allocation18], 0
    %26 = vsyncpa [#allocation21], 0
    %27 = vsyncpa [#allocation4], 0
    %s28 = scalar_lea.sflag [#allocation4], 1
    %29 = vsyncpa %s28, 0
    loop: start=0, step=1, limit=4
    $region2: #{tpu_custom_call.1} parent=1 // loop_pre_header
      _
    $region3: #{tpu_custom_call.1} parent=1 // loop_header
      %s31 = sphi 0, %s35
      %p32 = scmp.ge.s32.totalorder %s31, 4
      %s41 = sphi 0, %s43
      %s44 = sphi 0, %s41
      %s45 = sphi 0, %s44
      %s61 = sphi 0, %s45
      %s65 = sphi 0, %s65
      %s67 = sphi 0, %s65
      %s68 = sphi 0, %s67
      %s82 = sphi 0, %s68
      %s86 = sphi 0, %s86
      %s88 = sphi 0, %s86
      %s89 = sphi 0, %s88
      %s103 = sphi 0, %s89
      %s107 = sphi 0, %s107
      %s109 = sphi 0, %s107
      %s110 = sphi 0, %s109
      %s124 = sphi 0, %s110
      %s128 = sphi 0, %s128
      %s130 = sphi 0, %s128
      %s131 = sphi 0, %s130
      %s145 = sphi 0, %s131
      %s149 = sphi 0, %s149
      %s151 = sphi 0, %s149
      %s152 = sphi 0, %s151
      %s166 = sphi 0, %s152
      %s170 = sphi 0, %s170
      %s172 = sphi 0, %s170
      %s173 = sphi 0, %s172
      %s187 = sphi 0, %s173
      %s191 = sphi 0, %s191
      %s193 = sphi 0, %s191
      %s194 = sphi 0, %s193
      %s208 = sphi 0, %s194
      %s212 = sphi 0, %s212
      %s214 = sphi 0, %s212
      %s215 = sphi 0, %s214
      %s229 = sphi 0, %s215
      %s233 = sphi 0, %s233
      %s235 = sphi 0, %s233
      %s236 = sphi 0, %s235
      %s250 = sphi 0, %s236
      %s254 = sphi 0, %s254
      %s256 = sphi 0, %s254
      %s257 = sphi 0, %s256
      %s271 = sphi 0, %s257
      %s275 = sphi 0, %s275
      %s277 = sphi 0, %s275
      %s278 = sphi 0, %s277
      %s292 = sphi 0, %s278
      %s296 = sphi 0, %s296
      %s298 = sphi 0, %s296
      %s299 = sphi 0, %s298
      %s313 = sphi 0, %s299
      %s319 = sphi 0, %s321
      %s322 = sphi 0, %s319
      %s323 = sphi 0, %s322
      %s339 = sphi 0, %s323
    $region4: #{tpu_custom_call.1} parent=1 // loop_header_branch
      %34 = sbr.rel (%p32) target = $region8
    $region5: #{tpu_custom_call.1} parent=1 // loop_body
      %s36 = ssub.s32 %s31, 1
      %s37 = ssub.s32 %s31, 2
      %s38 = sadd.s32 %s31, 1
      %s39 = ssub.s32 %s31, %s38
      %p40 = scmp.eq.s32.totalorder %s39, 0
      %s42 = sadd.s32 %s41, 1
      %s43 = scalar_select %p40, %s41, %s42
      %p46 = pneg %p40
      %p47 = scmp.eq.s32.totalorder %s31, 1
      %p48 = por %p46, %p47
      %p49 = scmp.ne.s32.totalorder %s41, %s44
      %p50 = scmp.eq.s32.totalorder %s31, 0
      %p51 = por %p49, %p50
      %p52 = scmp.ne.s32.totalorder %s41, %s44
      %p53 = scmp.eq.s32.totalorder %s36, 1
      %p54 = por %p52, %p53
      %p55 = scmp.ne.s32.totalorder %s44, %s45
      %p56 = scmp.eq.s32.totalorder %s36, 0
      %p57 = por %p55, %p56
      %p58 = scmp.ne.s32.totalorder %s44, %s45
      %p59 = scmp.eq.s32.totalorder %s37, 1
      %p60 = por %p58, %p59
      %p62 = scmp.ne.s32.totalorder %s45, %s61
      %p63 = scmp.eq.s32.totalorder %s37, 0
      %p64 = por %p62, %p63
      %s66 = sadd.s32 %s65, 1
      %p69 = scmp.eq.s32.totalorder %s31, 1
      %p70 = scmp.ne.s32.totalorder %s65, %s67
      %p71 = scmp.eq.s32.totalorder %s31, 0
      %p72 = por %p70, %p71
      %p73 = scmp.ne.s32.totalorder %s65, %s67
      %p74 = scmp.eq.s32.totalorder %s36, 1
      %p75 = por %p73, %p74
      %p76 = scmp.ne.s32.totalorder %s67, %s68
      %p77 = scmp.eq.s32.totalorder %s36, 0
      %p78 = por %p76, %p77
      %p79 = scmp.ne.s32.totalorder %s67, %s68
      %p80 = scmp.eq.s32.totalorder %s37, 1
      %p81 = por %p79, %p80
      %p83 = scmp.ne.s32.totalorder %s68, %s82
      %p84 = scmp.eq.s32.totalorder %s37, 0
      %p85 = por %p83, %p84
      %s87 = sadd.s32 %s86, 1
      %p90 = scmp.eq.s32.totalorder %s31, 1
      %p91 = scmp.ne.s32.totalorder %s86, %s88
      %p92 = scmp.eq.s32.totalorder %s31, 0
      %p93 = por %p91, %p92
      %p94 = scmp.ne.s32.totalorder %s86, %s88
      %p95 = scmp.eq.s32.totalorder %s36, 1
      %p96 = por %p94, %p95
      %p97 = scmp.ne.s32.totalorder %s88, %s89
      %p98 = scmp.eq.s32.totalorder %s36, 0
      %p99 = por %p97, %p98
      %p100 = scmp.ne.s32.totalorder %s88, %s89
      %p101 = scmp.eq.s32.totalorder %s37, 1
      %p102 = por %p100, %p101
      %p104 = scmp.ne.s32.totalorder %s89, %s103
      %p105 = scmp.eq.s32.totalorder %s37, 0
      %p106 = por %p104, %p105
      %s108 = sadd.s32 %s107, 1
      %p111 = scmp.eq.s32.totalorder %s31, 1
      %p112 = scmp.ne.s32.totalorder %s107, %s109
      %p113 = scmp.eq.s32.totalorder %s31, 0
      %p114 = por %p112, %p113
      %p115 = scmp.ne.s32.totalorder %s107, %s109
      %p116 = scmp.eq.s32.totalorder %s36, 1
      %p117 = por %p115, %p116
      %p118 = scmp.ne.s32.totalorder %s109, %s110
      %p119 = scmp.eq.s32.totalorder %s36, 0
      %p120 = por %p118, %p119
      %p121 = scmp.ne.s32.totalorder %s109, %s110
      %p122 = scmp.eq.s32.totalorder %s37, 1
      %p123 = por %p121, %p122
      %p125 = scmp.ne.s32.totalorder %s110, %s124
      %p126 = scmp.eq.s32.totalorder %s37, 0
      %p127 = por %p125, %p126
      %s129 = sadd.s32 %s128, 1
      %p132 = scmp.eq.s32.totalorder %s31, 1
      %p133 = scmp.ne.s32.totalorder %s128, %s130
      %p134 = scmp.eq.s32.totalorder %s31, 0
      %p135 = por %p133, %p134
      %p136 = scmp.ne.s32.totalorder %s128, %s130
      %p137 = scmp.eq.s32.totalorder %s36, 1
      %p138 = por %p136, %p137
      %p139 = scmp.ne.s32.totalorder %s130, %s131
      %p140 = scmp.eq.s32.totalorder %s36, 0
      %p141 = por %p139, %p140
      %p142 = scmp.ne.s32.totalorder %s130, %s131
      %p143 = scmp.eq.s32.totalorder %s37, 1
      %p144 = por %p142, %p143
      %p146 = scmp.ne.s32.totalorder %s131, %s145
      %p147 = scmp.eq.s32.totalorder %s37, 0
      %p148 = por %p146, %p147
      %s150 = sadd.s32 %s149, 1
      %p153 = scmp.eq.s32.totalorder %s31, 1
      %p154 = scmp.ne.s32.totalorder %s149, %s151
      %p155 = scmp.eq.s32.totalorder %s31, 0
      %p156 = por %p154, %p155
      %p157 = scmp.ne.s32.totalorder %s149, %s151
      %p158 = scmp.eq.s32.totalorder %s36, 1
      %p159 = por %p157, %p158
      %p160 = scmp.ne.s32.totalorder %s151, %s152
      %p161 = scmp.eq.s32.totalorder %s36, 0
      %p162 = por %p160, %p161
      %p163 = scmp.ne.s32.totalorder %s151, %s152
      %p164 = scmp.eq.s32.totalorder %s37, 1
      %p165 = por %p163, %p164
      %p167 = scmp.ne.s32.totalorder %s152, %s166
      %p168 = scmp.eq.s32.totalorder %s37, 0
      %p169 = por %p167, %p168
      %s171 = sadd.s32 %s170, 1
      %p174 = scmp.eq.s32.totalorder %s31, 1
      %p175 = scmp.ne.s32.totalorder %s170, %s172
      %p176 = scmp.eq.s32.totalorder %s31, 0
      %p177 = por %p175, %p176
      %p178 = scmp.ne.s32.totalorder %s170, %s172
      %p179 = scmp.eq.s32.totalorder %s36, 1
      %p180 = por %p178, %p179
      %p181 = scmp.ne.s32.totalorder %s172, %s173
      %p182 = scmp.eq.s32.totalorder %s36, 0
      %p183 = por %p181, %p182
      %p184 = scmp.ne.s32.totalorder %s172, %s173
      %p185 = scmp.eq.s32.totalorder %s37, 1
      %p186 = por %p184, %p185
      %p188 = scmp.ne.s32.totalorder %s173, %s187
      %p189 = scmp.eq.s32.totalorder %s37, 0
      %p190 = por %p188, %p189
      %s192 = sadd.s32 %s191, 1
      %p195 = scmp.eq.s32.totalorder %s31, 1
      %p196 = scmp.ne.s32.totalorder %s191, %s193
      %p197 = scmp.eq.s32.totalorder %s31, 0
      %p198 = por %p196, %p197
      %p199 = scmp.ne.s32.totalorder %s191, %s193
      %p200 = scmp.eq.s32.totalorder %s36, 1
      %p201 = por %p199, %p200
      %p202 = scmp.ne.s32.totalorder %s193, %s194
      %p203 = scmp.eq.s32.totalorder %s36, 0
      %p204 = por %p202, %p203
      %p205 = scmp.ne.s32.totalorder %s193, %s194
      %p206 = scmp.eq.s32.totalorder %s37, 1
      %p207 = por %p205, %p206
      %p209 = scmp.ne.s32.totalorder %s194, %s208
      %p210 = scmp.eq.s32.totalorder %s37, 0
      %p211 = por %p209, %p210
      %s213 = sadd.s32 %s212, 1
      %p216 = scmp.eq.s32.totalorder %s31, 1
      %p217 = scmp.ne.s32.totalorder %s212, %s214
      %p218 = scmp.eq.s32.totalorder %s31, 0
      %p219 = por %p217, %p218
      %p220 = scmp.ne.s32.totalorder %s212, %s214
      %p221 = scmp.eq.s32.totalorder %s36, 1
      %p222 = por %p220, %p221
      %p223 = scmp.ne.s32.totalorder %s214, %s215
      %p224 = scmp.eq.s32.totalorder %s36, 0
      %p225 = por %p223, %p224
      %p226 = scmp.ne.s32.totalorder %s214, %s215
      %p227 = scmp.eq.s32.totalorder %s37, 1
      %p228 = por %p226, %p227
      %p230 = scmp.ne.s32.totalorder %s215, %s229
      %p231 = scmp.eq.s32.totalorder %s37, 0
      %p232 = por %p230, %p231
      %s234 = sadd.s32 %s233, 1
      %p237 = scmp.eq.s32.totalorder %s31, 1
      %p238 = scmp.ne.s32.totalorder %s233, %s235
      %p239 = scmp.eq.s32.totalorder %s31, 0
      %p240 = por %p238, %p239
      %p241 = scmp.ne.s32.totalorder %s233, %s235
      %p242 = scmp.eq.s32.totalorder %s36, 1
      %p243 = por %p241, %p242
      %p244 = scmp.ne.s32.totalorder %s235, %s236
      %p245 = scmp.eq.s32.totalorder %s36, 0
      %p246 = por %p244, %p245
      %p247 = scmp.ne.s32.totalorder %s235, %s236
      %p248 = scmp.eq.s32.totalorder %s37, 1
      %p249 = por %p247, %p248
      %p251 = scmp.ne.s32.totalorder %s236, %s250
      %p252 = scmp.eq.s32.totalorder %s37, 0
      %p253 = por %p251, %p252
      %s255 = sadd.s32 %s254, 1
      %p258 = scmp.eq.s32.totalorder %s31, 1
      %p259 = scmp.ne.s32.totalorder %s254, %s256
      %p260 = scmp.eq.s32.totalorder %s31, 0
      %p261 = por %p259, %p260
      %p262 = scmp.ne.s32.totalorder %s254, %s256
      %p263 = scmp.eq.s32.totalorder %s36, 1
      %p264 = por %p262, %p263
      %p265 = scmp.ne.s32.totalorder %s256, %s257
      %p266 = scmp.eq.s32.totalorder %s36, 0
      %p267 = por %p265, %p266
      %p268 = scmp.ne.s32.totalorder %s256, %s257
      %p269 = scmp.eq.s32.totalorder %s37, 1
      %p270 = por %p268, %p269
      %p272 = scmp.ne.s32.totalorder %s257, %s271
      %p273 = scmp.eq.s32.totalorder %s37, 0
      %p274 = por %p272, %p273
      %s276 = sadd.s32 %s275, 1
      %p279 = scmp.eq.s32.totalorder %s31, 1
      %p280 = scmp.ne.s32.totalorder %s275, %s277
      %p281 = scmp.eq.s32.totalorder %s31, 0
      %p282 = por %p280, %p281
      %p283 = scmp.ne.s32.totalorder %s275, %s277
      %p284 = scmp.eq.s32.totalorder %s36, 1
      %p285 = por %p283, %p284
      %p286 = scmp.ne.s32.totalorder %s277, %s278
      %p287 = scmp.eq.s32.totalorder %s36, 0
      %p288 = por %p286, %p287
      %p289 = scmp.ne.s32.totalorder %s277, %s278
      %p290 = scmp.eq.s32.totalorder %s37, 1
      %p291 = por %p289, %p290
      %p293 = scmp.ne.s32.totalorder %s278, %s292
      %p294 = scmp.eq.s32.totalorder %s37, 0
      %p295 = por %p293, %p294
      %s297 = sadd.s32 %s296, 1
      %p300 = scmp.eq.s32.totalorder %s31, 1
      %p301 = scmp.ne.s32.totalorder %s296, %s298
      %p302 = scmp.eq.s32.totalorder %s31, 0
      %p303 = por %p301, %p302
      %p304 = scmp.ne.s32.totalorder %s296, %s298
      %p305 = scmp.eq.s32.totalorder %s36, 1
      %p306 = por %p304, %p305
      %p307 = scmp.ne.s32.totalorder %s298, %s299
      %p308 = scmp.eq.s32.totalorder %s36, 0
      %p309 = por %p307, %p308
      %p310 = scmp.ne.s32.totalorder %s298, %s299
      %p311 = scmp.eq.s32.totalorder %s37, 1
      %p312 = por %p310, %p311
      %p314 = scmp.ne.s32.totalorder %s299, %s313
      %p315 = scmp.eq.s32.totalorder %s37, 0
      %p316 = por %p314, %p315
      %s317 = ssub.s32 %s31, %s38
      %p318 = scmp.eq.s32.totalorder %s317, 0
      %s320 = sadd.s32 %s319, 1
      %s321 = scalar_select %p318, %s319, %s320
      %p324 = pneg %p318
      %p325 = scmp.eq.s32.totalorder %s31, 1
      %p326 = por %p324, %p325
      %p327 = scmp.ne.s32.totalorder %s319, %s322
      %p328 = scmp.eq.s32.totalorder %s31, 0
      %p329 = por %p327, %p328
      %p330 = scmp.ne.s32.totalorder %s319, %s322
      %p331 = scmp.eq.s32.totalorder %s36, 1
      %p332 = por %p330, %p331
      %p333 = scmp.ne.s32.totalorder %s322, %s323
      %p334 = scmp.eq.s32.totalorder %s36, 0
      %p335 = por %p333, %p334
      %p336 = scmp.ne.s32.totalorder %s322, %s323
      %p337 = scmp.eq.s32.totalorder %s37, 1
      %p338 = por %p336, %p337
      %p340 = scmp.ne.s32.totalorder %s323, %s339
      %p341 = scmp.eq.s32.totalorder %s37, 0
      %p342 = por %p340, %p341
      %p343 = scmp.le.s32.totalorder 1, %s31
      %p344 = scmp.lt.s32.totalorder %s31, 3
      %p345 = pnand %p343, %p344
      %p346 = pneg %p345
      // Predicated region
      $region9: #{tpu_custom_call.1} parent=5 // pred_check
        _
      $region10: #{tpu_custom_call.1} parent=5 // pred_check_branch
        %348 = sbr.rel (%p345) target = $region12
      $region11: #{tpu_custom_call.1} parent=5 // pred_region
        %s349 = ssub.s32 %s31, 1
        // Predicated region
        $region13: #{tpu_custom_call.1} parent=11 // pred_check
          %p350 = pneg %p78
        $region14: #{tpu_custom_call.1} parent=11 // pred_check_branch
          %352 = sbr.rel (%p350) target = $region16
        $region15: #{tpu_custom_call.1} parent=11 // pred_region
          %s354 = ssub.s32 16, 16
          %355 = vsyncadd [#allocation6], %s354
          %s357 = sshll.u32 [#allocation5], 4
          %s358 = int_to_ptr.vmem [resolvable:$true] %s357
          %360 = dma.hbm_to_vmem [thread:$0]  %s1, 16, %s358, [#allocation6]
        $region16: #{tpu_custom_call.1} parent=11 // pred_fallthru
          _
        // Predicated region
        $region17: #{tpu_custom_call.1} parent=11 // pred_check
          %p361 = pneg %p99
        $region18: #{tpu_custom_call.1} parent=11 // pred_check_branch
          %363 = sbr.rel (%p361) target = $region20
        $region19: #{tpu_custom_call.1} parent=11 // pred_region
          %s365 = ssub.s32 16, 16
          %366 = vsyncadd [#allocation6], %s365
          %s368 = sshll.u32 [#allocation7], 4
          %s369 = int_to_ptr.vmem [resolvable:$true] %s368
          %371 = dma.hbm_to_vmem [thread:$0]  %s2, 16, %s369, [#allocation6]
        $region20: #{tpu_custom_call.1} parent=11 // pred_fallthru
          _
        // Predicated region
        $region21: #{tpu_custom_call.1} parent=11 // pred_check
          %p372 = pneg %p120
        $region22: #{tpu_custom_call.1} parent=11 // pred_check_branch
          %374 = sbr.rel (%p372) target = $region24
        $region23: #{tpu_custom_call.1} parent=11 // pred_region
          %s376 = ssub.s32 3072, 3072
          %377 = vsyncadd [#allocation9], %s376
          %s378 = sshll.u32 [#allocation8], 4
          %s379 = int_to_ptr.vmem [resolvable:$true] %s378
          %384 = dma.hbm_to_vmem [thread:$0]  %s3, 3072, %s379, [#allocation9], 192, 192, 12
        $region24: #{tpu_custom_call.1} parent=11 // pred_fallthru
          _
        // Predicated region
        $region25: #{tpu_custom_call.1} parent=11 // pred_check
          %p385 = pneg %p141
        $region26: #{tpu_custom_call.1} parent=11 // pred_check_branch
          %387 = sbr.rel (%p385) target = $region28
        $region27: #{tpu_custom_call.1} parent=11 // pred_region
          %s389 = ssub.s32 48, 48
          %390 = vsyncadd [#allocation9], %s389
          %s392 = sshll.u32 [#allocation10], 4
          %s393 = int_to_ptr.vmem [resolvable:$true] %s392
          %395 = dma.hbm_to_vmem [thread:$0]  %s4, 48, %s393, [#allocation9]
        $region28: #{tpu_custom_call.1} parent=11 // pred_fallthru
          _
        // Predicated region
        $region29: #{tpu_custom_call.1} parent=11 // pred_check
          %p396 = pneg %p162
        $region30: #{tpu_custom_call.1} parent=11 // pred_check_branch
          %398 = sbr.rel (%p396) target = $region32
        $region31: #{tpu_custom_call.1} parent=11 // pred_region
          %s400 = ssub.s32 1024, 1024
          %401 = vsyncadd [#allocation12], %s400
          %s402 = sshll.u32 [#allocation11], 4
          %s403 = int_to_ptr.vmem [resolvable:$true] %s402
          %408 = dma.hbm_to_vmem [thread:$0]  %s5, 1024, %s403, [#allocation12], 64, 64, 4
        $region32: #{tpu_custom_call.1} parent=11 // pred_fallthru
          _
        // Predicated region
        $region33: #{tpu_custom_call.1} parent=11 // pred_check
          %p409 = pneg %p183
        $region34: #{tpu_custom_call.1} parent=11 // pred_check_branch
          %411 = sbr.rel (%p409) target = $region36
        $region35: #{tpu_custom_call.1} parent=11 // pred_region
          %s413 = ssub.s32 16, 16
          %414 = vsyncadd [#allocation12], %s413
          %s416 = sshll.u32 [#allocation13], 4
          %s417 = int_to_ptr.vmem [resolvable:$true] %s416
          %419 = dma.hbm_to_vmem [thread:$0]  %s6, 16, %s417, [#allocation12]
        $region36: #{tpu_custom_call.1} parent=11 // pred_fallthru
          _
        // Predicated region
        $region37: #{tpu_custom_call.1} parent=11 // pred_check
          %p420 = pneg %p204
        $region38: #{tpu_custom_call.1} parent=11 // pred_check_branch
          %422 = sbr.rel (%p420) target = $region40
        $region39: #{tpu_custom_call.1} parent=11 // pred_region
          %s424 = ssub.s32 16, 16
          %425 = vsyncadd [#allocation15], %s424
          %s427 = sshll.u32 [#allocation14], 4
          %s428 = int_to_ptr.vmem [resolvable:$true] %s427
          %430 = dma.hbm_to_vmem [thread:$0]  %s7, 16, %s428, [#allocation15]
        $region40: #{tpu_custom_call.1} parent=11 // pred_fallthru
          _
        // Predicated region
        $region41: #{tpu_custom_call.1} parent=11 // pred_check
          %p431 = pneg %p225
        $region42: #{tpu_custom_call.1} parent=11 // pred_check_branch
          %433 = sbr.rel (%p431) target = $region44
        $region43: #{tpu_custom_call.1} parent=11 // pred_region
          %s435 = ssub.s32 16, 16
          %436 = vsyncadd [#allocation15], %s435
          %s438 = sshll.u32 [#allocation16], 4
          %s439 = int_to_ptr.vmem [resolvable:$true] %s438
          %441 = dma.hbm_to_vmem [thread:$0]  %s8, 16, %s439, [#allocation15]
        $region44: #{tpu_custom_call.1} parent=11 // pred_fallthru
          _
        // Predicated region
        $region45: #{tpu_custom_call.1} parent=11 // pred_check
          %p442 = pneg %p246
        $region46: #{tpu_custom_call.1} parent=11 // pred_check_branch
          %444 = sbr.rel (%p442) target = $region48
        $region47: #{tpu_custom_call.1} parent=11 // pred_region
          %s446 = ssub.s32 4096, 4096
          %447 = vsyncadd [#allocation18], %s446
          %s448 = sshll.u32 [#allocation17], 4
          %s449 = int_to_ptr.vmem [resolvable:$true] %s448
          %454 = dma.hbm_to_vmem [thread:$0]  %s9, 4096, %s449, [#allocation18], 256, 256, 16
        $region48: #{tpu_custom_call.1} parent=11 // pred_fallthru
          _
        // Predicated region
        $region49: #{tpu_custom_call.1} parent=11 // pred_check
          %p455 = pneg %p267
        $region50: #{tpu_custom_call.1} parent=11 // pred_check_branch
          %457 = sbr.rel (%p455) target = $region52
        $region51: #{tpu_custom_call.1} parent=11 // pred_region
          %s459 = ssub.s32 64, 64
          %460 = vsyncadd [#allocation18], %s459
          %s462 = sshll.u32 [#allocation19], 4
          %s463 = int_to_ptr.vmem [resolvable:$true] %s462
          %465 = dma.hbm_to_vmem [thread:$0]  %s10, 64, %s463, [#allocation18]
        $region52: #{tpu_custom_call.1} parent=11 // pred_fallthru
          _
        // Predicated region
        $region53: #{tpu_custom_call.1} parent=11 // pred_check
          %p466 = pneg %p288
        $region54: #{tpu_custom_call.1} parent=11 // pred_check_branch
          %468 = sbr.rel (%p466) target = $region56
        $region55: #{tpu_custom_call.1} parent=11 // pred_region
          %s470 = ssub.s32 4096, 4096
          %471 = vsyncadd [#allocation21], %s470
          %s472 = sshll.u32 [#allocation20], 4
          %s473 = int_to_ptr.vmem [resolvable:$true] %s472
          %478 = dma.hbm_to_vmem [thread:$0]  %s11, 4096, %s473, [#allocation21], 64, 64, 4
        $region56: #{tpu_custom_call.1} parent=11 // pred_fallthru
          _
        // Predicated region
        $region57: #{tpu_custom_call.1} parent=11 // pred_check
          %p479 = pneg %p309
        $region58: #{tpu_custom_call.1} parent=11 // pred_check_branch
          %481 = sbr.rel (%p479) target = $region60
        $region59: #{tpu_custom_call.1} parent=11 // pred_region
          %s483 = ssub.s32 16, 16
          %484 = vsyncadd [#allocation21], %s483
          %s486 = sshll.u32 [#allocation22], 4
          %s487 = int_to_ptr.vmem [resolvable:$true] %s486
          %489 = dma.hbm_to_vmem [thread:$0]  %s12, 16, %s487, [#allocation21]
        $region60: #{tpu_custom_call.1} parent=11 // pred_fallthru
          _
      $region12: #{tpu_custom_call.1} parent=5 // pred_fallthru
        _
      %p490 = scmp.lt.s32.totalorder %s31, 2
      // Predicated region
      $region61: #{tpu_custom_call.1} parent=5 // pred_check
        %p491 = pneg %p490
      $region62: #{tpu_custom_call.1} parent=5 // pred_check_branch
        %493 = sbr.rel (%p491) target = $region64
      $region63: #{tpu_custom_call.1} parent=5 // pred_region
        // Predicated region
        $region65: #{tpu_custom_call.1} parent=63 // pred_check
          %p494 = pneg %p51
        $region66: #{tpu_custom_call.1} parent=63 // pred_check_branch
          %496 = sbr.rel (%p494) target = $region68
        $region67: #{tpu_custom_call.1} parent=63 // pred_region
          %s497 = sand.u32 %s41, 1
          %s498 = scalar_lea.sflag [#allocation3], %s497
          %s499 = sand.u32 %s41, 1
          %s500 = smul.addr %s499, 16
          %s501 = scalar_lea.vmem [#allocation2], %s500
          %s503 = ssub.s32 256, 256
          %504 = vsyncadd %s498, %s503
          %s505 = smul.addr %s31, 2
          %s506 = smul.addr %s505, 128
          %s507 = scalar_lea.hbm %s0, %s506
          %s508 = sshll.u32 %s501, 4
          %s509 = int_to_ptr.vmem [resolvable:$true] %s508
          %514 = dma.hbm_to_vmem [thread:$0]  %s507, 256, %s509, %s498, 128, 128, 8
        $region68: #{tpu_custom_call.1} parent=63 // pred_fallthru
          _
      $region64: #{tpu_custom_call.1} parent=5 // pred_fallthru
        _
      %p515 = scmp.le.s32.totalorder 1, %s31
      %p516 = scmp.lt.s32.totalorder %s31, 3
      %p517 = pnand %p515, %p516
      %p518 = pneg %p517
      // Predicated region
      $region69: #{tpu_custom_call.1} parent=5 // pred_check
        _
      $region70: #{tpu_custom_call.1} parent=5 // pred_check_branch
        %520 = sbr.rel (%p517) target = $region72
      $region71: #{tpu_custom_call.1} parent=5 // pred_region
        %s521 = ssub.s32 %s31, 1
        %s522 = sand.u32 %s44, 1
        %s523 = scalar_lea.sflag [#allocation3], %s522
        %s524 = sand.u32 %s44, 1
        %s525 = smul.addr %s524, 16
        %s526 = scalar_lea.vmem [#allocation2], %s525
        // Predicated region
        $region73: #{tpu_custom_call.1} parent=71 // pred_check
          %p527 = pneg %p57
        $region74: #{tpu_custom_call.1} parent=71 // pred_check_branch
          %529 = sbr.rel (%p527) target = $region76
        $region75: #{tpu_custom_call.1} parent=71 // pred_region
          %530 = dma.done %s523, 256
        $region76: #{tpu_custom_call.1} parent=71 // pred_fallthru
          _
        // Predicated region
        $region77: #{tpu_custom_call.1} parent=71 // pred_check
          %p531 = pneg %p78
        $region78: #{tpu_custom_call.1} parent=71 // pred_check_branch
          %533 = sbr.rel (%p531) target = $region80
        $region79: #{tpu_custom_call.1} parent=71 // pred_region
          %534 = dma.done [#allocation6], 16
        $region80: #{tpu_custom_call.1} parent=71 // pred_fallthru
          _
        // Predicated region
        $region81: #{tpu_custom_call.1} parent=71 // pred_check
          %p535 = pneg %p99
        $region82: #{tpu_custom_call.1} parent=71 // pred_check_branch
          %537 = sbr.rel (%p535) target = $region84
        $region83: #{tpu_custom_call.1} parent=71 // pred_region
          %538 = dma.done [#allocation6], 16
        $region84: #{tpu_custom_call.1} parent=71 // pred_fallthru
          _
        // Predicated region
        $region85: #{tpu_custom_call.1} parent=71 // pred_check
          %p539 = pneg %p120
        $region86: #{tpu_custom_call.1} parent=71 // pred_check_branch
          %541 = sbr.rel (%p539) target = $region88
        $region87: #{tpu_custom_call.1} parent=71 // pred_region
          %542 = dma.done [#allocation9], 3072
        $region88: #{tpu_custom_call.1} parent=71 // pred_fallthru
          _
        // Predicated region
        $region89: #{tpu_custom_call.1} parent=71 // pred_check
          %p543 = pneg %p141
        $region90: #{tpu_custom_call.1} parent=71 // pred_check_branch
          %545 = sbr.rel (%p543) target = $region92
        $region91: #{tpu_custom_call.1} parent=71 // pred_region
          %546 = dma.done [#allocation9], 48
        $region92: #{tpu_custom_call.1} parent=71 // pred_fallthru
          _
        // Predicated region
        $region93: #{tpu_custom_call.1} parent=71 // pred_check
          %p547 = pneg %p162
        $region94: #{tpu_custom_call.1} parent=71 // pred_check_branch
          %549 = sbr.rel (%p547) target = $region96
        $region95: #{tpu_custom_call.1} parent=71 // pred_region
          %550 = dma.done [#allocation12], 1024
        $region96: #{tpu_custom_call.1} parent=71 // pred_fallthru
          _
        // Predicated region
        $region97: #{tpu_custom_call.1} parent=71 // pred_check
          %p551 = pneg %p183
        $region98: #{tpu_custom_call.1} parent=71 // pred_check_branch
          %553 = sbr.rel (%p551) target = $region100
        $region99: #{tpu_custom_call.1} parent=71 // pred_region
          %554 = dma.done [#allocation12], 16
        $region100: #{tpu_custom_call.1} parent=71 // pred_fallthru
          _
        // Predicated region
        $region101: #{tpu_custom_call.1} parent=71 // pred_check
          %p555 = pneg %p204
        $region102: #{tpu_custom_call.1} parent=71 // pred_check_branch
          %557 = sbr.rel (%p555) target = $region104
        $region103: #{tpu_custom_call.1} parent=71 // pred_region
          %558 = dma.done [#allocation15], 16
        $region104: #{tpu_custom_call.1} parent=71 // pred_fallthru
          _
        // Predicated region
        $region105: #{tpu_custom_call.1} parent=71 // pred_check
          %p559 = pneg %p225
        $region106: #{tpu_custom_call.1} parent=71 // pred_check_branch
          %561 = sbr.rel (%p559) target = $region108
        $region107: #{tpu_custom_call.1} parent=71 // pred_region
          %562 = dma.done [#allocation15], 16
        $region108: #{tpu_custom_call.1} parent=71 // pred_fallthru
          _
        // Predicated region
        $region109: #{tpu_custom_call.1} parent=71 // pred_check
          %p563 = pneg %p246
        $region110: #{tpu_custom_call.1} parent=71 // pred_check_branch
          %565 = sbr.rel (%p563) target = $region112
        $region111: #{tpu_custom_call.1} parent=71 // pred_region
          %566 = dma.done [#allocation18], 4096
        $region112: #{tpu_custom_call.1} parent=71 // pred_fallthru
          _
        // Predicated region
        $region113: #{tpu_custom_call.1} parent=71 // pred_check
          %p567 = pneg %p267
        $region114: #{tpu_custom_call.1} parent=71 // pred_check_branch
          %569 = sbr.rel (%p567) target = $region116
        $region115: #{tpu_custom_call.1} parent=71 // pred_region
          %570 = dma.done [#allocation18], 64
        $region116: #{tpu_custom_call.1} parent=71 // pred_fallthru
          _
        // Predicated region
        $region117: #{tpu_custom_call.1} parent=71 // pred_check
          %p571 = pneg %p288
        $region118: #{tpu_custom_call.1} parent=71 // pred_check_branch
          %573 = sbr.rel (%p571) target = $region120
        $region119: #{tpu_custom_call.1} parent=71 // pred_region
          %574 = dma.done [#allocation21], 4096
        $region120: #{tpu_custom_call.1} parent=71 // pred_fallthru
          _
        // Predicated region
        $region121: #{tpu_custom_call.1} parent=71 // pred_check
          %p575 = pneg %p309
        $region122: #{tpu_custom_call.1} parent=71 // pred_check_branch
          %577 = sbr.rel (%p575) target = $region124
        $region123: #{tpu_custom_call.1} parent=71 // pred_region
          %578 = dma.done [#allocation21], 16
        $region124: #{tpu_custom_call.1} parent=71 // pred_fallthru
          _
        %s579 = sand.u32 %s44, 1
        %s580 = scalar_lea.sflag [#allocation3], %s579
        %s581 = sand.u32 %s44, 1
        %s582 = smul.addr %s581, 16
        %s583 = scalar_lea.vmem [#allocation2], %s582
        %p584 = pneg %p57
        %p585 = pneg %p54
        %p586 = pneg %p78
        %p587 = pneg %p75
        %p588 = pneg %p99
        %p589 = pneg %p96
        %p590 = pneg %p120
        %p591 = pneg %p117
        %p592 = pneg %p141
        %p593 = pneg %p138
        %p594 = pneg %p162
        %p595 = pneg %p159
        %p596 = pneg %p183
        %p597 = pneg %p180
        %p598 = pneg %p204
        %p599 = pneg %p201
        %p600 = pneg %p225
        %p601 = pneg %p222
        %p602 = pneg %p246
        %p603 = pneg %p243
        %p604 = pneg %p267
        %p605 = pneg %p264
        %p606 = pneg %p288
        %p607 = pneg %p285
        %p608 = pneg %p309
        %p609 = pneg %p306
        %p610 = pneg %p335
        %p611 = pneg %p332
        %s612 = sand.u32 %s322, 1
        %s613 = scalar_lea.sflag [#allocation4], %s612
        %s614 = sand.u32 %s322, 1
        %s615 = smul.addr %s614, 16
        %s616 = scalar_lea.vmem [#allocation23], %s615
        %v618 = vld [vmem:[%s526] sm:$0xff]
        %v619 = vld [vmem:[%s526 + $0x8] sm:$0xff]
        %v620 = vld [vmem:[#allocation5] sm:$0x1]
        %v621 = vld [vmem:[#allocation7] sm:$0x1]
        %622 = vadd.xlane.f32.xlu0 %v618
        %v623 = vpop.xlane.xlu0 %622
        %624 = vadd.xlane.f32.xlu0 %v619
        %v625 = vpop.xlane.xlu0 %624
        %v626 = vrcp.pop 128.0
        %v627 = vmul.f32 %v623, %v626
        %v628 = vmul.f32 %v625, %v626
        %v629 = vsub.f32 %v618, %v627
        %v630 = vsub.f32 %v619, %v628
        %v631 = vmul.f32 %v629, %v629
        %v632 = vmul.f32 %v630, %v630
        %633 = vadd.xlane.f32.xlu0 %v631
        %v634 = vpop.xlane.xlu0 %633
        %635 = vadd.xlane.f32.xlu0 %v632
        %v636 = vpop.xlane.xlu0 %635
        %v637 = vmul.f32 %v634, %v626
        %v638 = vmul.f32 %v636, %v626
        %v639 = vadd.f32 %v637, 1e-06
        %v640 = vadd.f32 %v638, 1e-06
        %v641 = vrsqrt.pop %v639
        %v642 = vrsqrt.pop %v640
        %v643 = vmul.f32 %v629, %v641
        %v644 = vmul.f32 %v630, %v642
        %v646 = vlaneseq
        %v647 = vshrl.u32 %v646, 7
        %v648 = vsub.s32 0, %v647
        %v649 = vrot.slane %v620, %v648
        %v651 = vmul.f32 %v643, %v649
        %v652 = vmul.f32 %v644, %v649
        %v654 = vlaneseq
        %v655 = vshrl.u32 %v654, 7
        %v656 = vsub.s32 0, %v655
        %v657 = vrot.slane %v621, %v656
        %v659 = vadd.f32 %v651, %v657
        %v660 = vadd.f32 %v652, %v657
        %v661 = vpack.c.bf16 %v660, %v659
        %v662 = vld [vmem:[#allocation8] sm:$0xff]
        %v663 = vld [vmem:[#allocation8 + $0x8] sm:$0xf]
        %v664 = vld [vmem:[#allocation8 + $0xc] sm:$0xff]
        %v665 = vld [vmem:[#allocation8 + $0x14] sm:$0xf]
        %v666 = vld [vmem:[#allocation8 + $0x18] sm:$0xff]
        %v667 = vld [vmem:[#allocation8 + $0x20] sm:$0xf]
        %v668 = vld [vmem:[#allocation8 + $0x24] sm:$0xff]
        %v669 = vld [vmem:[#allocation8 + $0x2c] sm:$0xf]
        %v670 = vld [vmem:[#allocation8 + $0x30] sm:$0xff]
        %v671 = vld [vmem:[#allocation8 + $0x38] sm:$0xf]
        %v672 = vld [vmem:[#allocation8 + $0x3c] sm:$0xff]
        %v673 = vld [vmem:[#allocation8 + $0x44] sm:$0xf]
        %v674 = vld [vmem:[#allocation8 + $0x48] sm:$0xff]
        %v675 = vld [vmem:[#allocation8 + $0x50] sm:$0xf]
        %v676 = vld [vmem:[#allocation8 + $0x54] sm:$0xff]
        %v677 = vld [vmem:[#allocation8 + $0x5c] sm:$0xf]
        %v678 = vld [vmem:[#allocation8 + $0x60] sm:$0xff]
        %v679 = vld [vmem:[#allocation8 + $0x68] sm:$0xf]
        %v680 = vld [vmem:[#allocation8 + $0x6c] sm:$0xff]
        %v681 = vld [vmem:[#allocation8 + $0x74] sm:$0xf]
        %v682 = vld [vmem:[#allocation8 + $0x78] sm:$0xff]
        %v683 = vld [vmem:[#allocation8 + $0x80] sm:$0xf]
        %v684 = vld [vmem:[#allocation8 + $0x84] sm:$0xff]
        %v685 = vld [vmem:[#allocation8 + $0x8c] sm:$0xf]
        %v686 = vld [vmem:[#allocation8 + $0x90] sm:$0xff]
        %v687 = vld [vmem:[#allocation8 + $0x98] sm:$0xf]
        %v688 = vld [vmem:[#allocation8 + $0x9c] sm:$0xff]
        %v689 = vld [vmem:[#allocation8 + $0xa4] sm:$0xf]
        %v690 = vld [vmem:[#allocation8 + $0xa8] sm:$0xff]
        %v691 = vld [vmem:[#allocation8 + $0xb0] sm:$0xf]
        %v692 = vld [vmem:[#allocation8 + $0xb4] sm:$0xff]
        %v693 = vld [vmem:[#allocation8 + $0xbc] sm:$0xf]
        %v694 = vld [vmem:[#allocation10] sm:$0x7]
        %v696 = vlaneseq
        %v697 = vshrl.u32 %v696, 7
        %v698 = vsub.s32 0, %v697
        %v699 = vrot.slane %v694, %v698
        %v700 = vlaneseq
        %v701 = vshrl.u32 %v700, 7
        %v702 = vsub.s32 1, %v701
        %v703 = vrot.slane %v694, %v702
        %v704 = vlaneseq
        %v705 = vshrl.u32 %v704, 7
        %v706 = vsub.s32 2, %v705
        %v707 = vrot.slane %v694, %v706
        %v743 = vunpack.c.l.b16 %v662
        %v744 = vunpack.c.h.b16 %v662
        %v745 = vunpack.c.l.b16 %v663
        %v746 = vunpack.c.l.b16 %v664
        %v747 = vunpack.c.h.b16 %v664
        %v748 = vunpack.c.l.b16 %v665
        %v749 = vunpack.c.l.b16 %v666
        %v750 = vunpack.c.h.b16 %v666
        %v751 = vunpack.c.l.b16 %v667
        %v752 = vunpack.c.l.b16 %v668
        %v753 = vunpack.c.h.b16 %v668
        %v754 = vunpack.c.l.b16 %v669
        %v755 = vunpack.c.l.b16 %v670
        %v756 = vunpack.c.h.b16 %v670
        %v757 = vunpack.c.l.b16 %v671
        %v758 = vunpack.c.l.b16 %v672
        %v759 = vunpack.c.h.b16 %v672
        %v760 = vunpack.c.l.b16 %v673
        %v761 = vunpack.c.l.b16 %v674
        %v762 = vunpack.c.h.b16 %v674
        %v763 = vunpack.c.l.b16 %v675
        %v764 = vunpack.c.l.b16 %v676
        %v765 = vunpack.c.h.b16 %v676
        %v766 = vunpack.c.l.b16 %v677
        %v767 = vunpack.c.l.b16 %v678
        %v768 = vunpack.c.h.b16 %v678
        %v769 = vunpack.c.l.b16 %v679
        %v770 = vunpack.c.l.b16 %v680
        %v771 = vunpack.c.h.b16 %v680
        %v772 = vunpack.c.l.b16 %v681
        %v773 = vunpack.c.l.b16 %v682
        %v774 = vunpack.c.h.b16 %v682
        %v775 = vunpack.c.l.b16 %v683
        %v776 = vunpack.c.l.b16 %v684
        %v777 = vunpack.c.h.b16 %v684
        %v778 = vunpack.c.l.b16 %v685
        %v779 = vunpack.c.l.b16 %v686
        %v780 = vunpack.c.h.b16 %v686
        %v781 = vunpack.c.l.b16 %v687
        %v782 = vunpack.c.l.b16 %v688
        %v783 = vunpack.c.h.b16 %v688
        %v784 = vunpack.c.l.b16 %v689
        %v785 = vunpack.c.l.b16 %v690
        %v786 = vunpack.c.h.b16 %v690
        %v787 = vunpack.c.l.b16 %v691
        %v788 = vunpack.c.l.b16 %v692
        %v789 = vunpack.c.h.b16 %v692
        %v790 = vunpack.c.l.b16 %v693
        %v791 = vpack.c.b16 %v746, %v743
        %v792 = vpack.c.b16 %v747, %v744
        %v793 = vpack.c.b16 %v748, %v745
        %v794 = vpack.c.b16 %v752, %v749
        %v795 = vpack.c.b16 %v753, %v750
        %v796 = vpack.c.b16 %v754, %v751
        %v797 = vpack.c.b16 %v758, %v755
        %v798 = vpack.c.b16 %v759, %v756
        %v799 = vpack.c.b16 %v760, %v757
        %v800 = vpack.c.b16 %v764, %v761
        %v801 = vpack.c.b16 %v765, %v762
        %v802 = vpack.c.b16 %v766, %v763
        %v803 = vpack.c.b16 %v770, %v767
        %v804 = vpack.c.b16 %v771, %v768
        %v805 = vpack.c.b16 %v772, %v769
        %v806 = vpack.c.b16 %v776, %v773
        %v807 = vpack.c.b16 %v777, %v774
        %v808 = vpack.c.b16 %v778, %v775
        %v809 = vpack.c.b16 %v782, %v779
        %v810 = vpack.c.b16 %v783, %v780
        %v811 = vpack.c.b16 %v784, %v781
        %v812 = vpack.c.b16 %v788, %v785
        %v813 = vpack.c.b16 %v789, %v786
        %v814 = vpack.c.b16 %v790, %v787
        %839 = vmatprep.subr.bf16.mxu0 %v792
        %840 = vmatpush1.bf16.msra.mxu0 %v791
        %841 = vmatprep.subr.bf16.mxu0 %v795
        %842 = vmatpush1.bf16.msra.mxu0 %v794
        %843 = vmatprep.subr.bf16.mxu0 %v798
        %844 = vmatpush1.bf16.msra.mxu0 %v797
        %845 = vmatprep.subr.bf16.mxu0 %v801
        %846 = vmatpush1.bf16.msra.mxu0 %v800
        %847 = vmatprep.subr.bf16.mxu0 %v804
        %848 = vmatpush1.bf16.msra.mxu0 %v803
        %849 = vmatprep.subr.bf16.mxu0 %v807
        %850 = vmatpush1.bf16.msra.mxu0 %v806
        %851 = vmatprep.subr.bf16.mxu0 %v810
        %852 = vmatpush1.bf16.msra.mxu0 %v809
        %853 = vmatprep.subr.bf16.mxu0 %v813
        %854 = vmatpush1.bf16.msra.mxu0 %v812
        %855 = vmatprep.subr.bf16.mxu0 0
        %856 = vmatpush1.bf16.msra.mxu0 0
        %857 = vmatprep.subr.bf16.mxu0 0
        %858 = vmatpush1.bf16.msra.mxu0 0
        %859 = vmatprep.subr.bf16.mxu0 0
        %860 = vmatpush1.bf16.msra.mxu0 0
        %861 = vmatprep.subr.bf16.mxu0 0
        %862 = vmatpush1.bf16.msra.mxu0 0
        %863 = vmatprep.subr.bf16.mxu0 0
        %864 = vmatpush1.bf16.msra.mxu0 0
        %865 = vmatprep.subr.bf16.mxu0 0
        %866 = vmatpush1.bf16.msra.mxu0 0
        %867 = vmatprep.subr.bf16.mxu0 0
        %868 = vmatpush1.bf16.msra.mxu0 0
        %869 = vmatprep.subr.bf16.mxu0 0
        %870 = vmatpush1.bf16.msra.mxu0 0
        %871 = vmatprep.mubr.bf16.mxu0 0
        %872 = vmatmul.mubr.bf16.gmra.mrb[0].mxu0 %v661
        %v873 = vpop.f32.mrb[0].mxu0
        %v874 = vadd.f32 %v699, %v873
        %v875 = vpop.f32.mrb[0].mxu0
        %v876 = vadd.f32 %v703, %v875
        %v877 = vpop.f32.mrb[0].mxu0
        %v878 = vadd.f32 %v699, %v877
        %v879 = vpop.f32.mrb[0].mxu0
        %v880 = vadd.f32 %v703, %v879
        %881 = vdwg.mxu0
        %882 = vmatprep.subr.bf16.mxu0 0
        %883 = vmatpush1.bf16.msra.mxu0 %v793
        %884 = vmatprep.subr.bf16.mxu0 0
        %885 = vmatpush1.bf16.msra.mxu0 %v796
        %886 = vmatprep.subr.bf16.mxu0 0
        %887 = vmatpush1.bf16.msra.mxu0 %v799
        %888 = vmatprep.subr.bf16.mxu0 0
        %889 = vmatpush1.bf16.msra.mxu0 %v802
        %890 = vmatprep.subr.bf16.mxu0 0
        %891 = vmatpush1.bf16.msra.mxu0 %v805
        %892 = vmatprep.subr.bf16.mxu0 0
        %893 = vmatpush1.bf16.msra.mxu0 %v808
        %894 = vmatprep.subr.bf16.mxu0 0
        %895 = vmatpush1.bf16.msra.mxu0 %v811
        %896 = vmatprep.subr.bf16.mxu0 0
        %897 = vmatpush1.bf16.msra.mxu0 %v814
        %898 = vmatprep.subr.bf16.mxu0 0
        %899 = vmatpush1.bf16.msra.mxu0 0
        %900 = vmatprep.subr.bf16.mxu0 0
        %901 = vmatpush1.bf16.msra.mxu0 0
        %902 = vmatprep.subr.bf16.mxu0 0
        %903 = vmatpush1.bf16.msra.mxu0 0
        %904 = vmatprep.subr.bf16.mxu0 0
        %905 = vmatpush1.bf16.msra.mxu0 0
        %906 = vmatprep.subr.bf16.mxu0 0
        %907 = vmatpush1.bf16.msra.mxu0 0
        %908 = vmatprep.subr.bf16.mxu0 0
        %909 = vmatpush1.bf16.msra.mxu0 0
        %910 = vmatprep.subr.bf16.mxu0 0
        %911 = vmatpush1.bf16.msra.mxu0 0
        %912 = vmatprep.subr.bf16.mxu0 0
        %913 = vmatpush1.bf16.msra.mxu0 0
        %914 = vmatprep.mubr.bf16.mxu0 0
        %915 = vmatmul.mubr.bf16.gmra.mrb[0].mxu0 %v661
        %v916 = vpop.f32.mrb[0].mxu0
        %v917 = vadd.f32 %v707, %v916
        %v918 = vpop.f32.mrb[0].mxu0
        %v919 = vpop.f32.mrb[0].mxu0
        %v920 = vadd.f32 %v707, %v919
        %v921 = vpop.f32.mrb[0].mxu0
        %922 = vdwg.mxu0
        %v923 = vmul.f32 %v874, 0.125
        %v924 = vmul.f32 %v878, 0.125
        %v925 = vpack.c.bf16 %v924, %v923
        %v926 = vpack.c.bf16 %v880, %v876
        %v927 = vpack.c.bf16 %v920, %v917
        %929 = vrot.lane.b32.xlu0 %v925, 64
        %v930 = vpop.permute.xlu0 %929
        %v933 = vpack.i.b16 %v930, %v925
        %v935 = vshrl.u32 %v925, 16
        %v936 = vshrl.u32 %v930, 16
        %v937 = vpack.i.b16 %v936, %v935
        %v940 = vpack.i.b16 0, 0
        %v942 = vshrl.u32 0, 16
        %v943 = vpack.i.b16 %v942, %v942
        %v945 = vcombine.high %v933, %v940
        %v947 = vunpack.c.l.s4 1983009808
        %v948 = vunpack.c.0.s8 %v947
        %v949 = vlaneseq
        %v950 = vshrl.u32 %v949, 7
        %v951 = vsub.s32 %v948, %v950
        %v952 = vrot.slane %v933, %v951
        %v954 = vunpack.c.l.s4 1983009808
        %v955 = vunpack.c.0.s8 %v954
        %v956 = vlaneseq
        %v957 = vshrl.u32 %v956, 7
        %v958 = vsub.s32 %v955, %v957
        %v959 = vrot.slane %v945, %v958
        %v960 = vcombine.high %v952, 0
        %v962 = vunpack.c.l.s4 1934713408
        %v963 = vunpack.c.0.s8 %v962
        %v964 = vlaneseq
        %v965 = vshrl.u32 %v964, 7
        %v966 = vsub.s32 %v963, %v965
        %v967 = vrot.slane %v952, %v966
        %v969 = vunpack.c.l.s4 1934713408
        %v970 = vunpack.c.0.s8 %v969
        %v971 = vlaneseq
        %v972 = vshrl.u32 %v971, 7
        %v973 = vsub.s32 %v970, %v972
        %v974 = vrot.slane %v960, %v973
        %v975 = vcombine.high %v959, 0
        %v977 = vunpack.c.l.s4 1934713408
        %v978 = vunpack.c.0.s8 %v977
        %v979 = vlaneseq
        %v980 = vshrl.u32 %v979, 7
        %v981 = vsub.s32 %v978, %v980
        %v982 = vrot.slane %v959, %v981
        %v984 = vunpack.c.l.s4 1934713408
        %v985 = vunpack.c.0.s8 %v984
        %v986 = vlaneseq
        %v987 = vshrl.u32 %v986, 7
        %v988 = vsub.s32 %v985, %v987
        %v989 = vrot.slane %v975, %v988
        %v990 = vcombine.high %v967, 0
        %v991 = vcombine.high %v974, 0
        %v992 = vcombine.high %v982, 0
        %v993 = vcombine.high %v989, 0
        %v994 = vcombine.high %v937, %v943
        %v996 = vunpack.c.l.s4 1983009808
        %v997 = vunpack.c.0.s8 %v996
        %v998 = vlaneseq
        %v999 = vshrl.u32 %v998, 7
        %v1000 = vsub.s32 %v997, %v999
        %v1001 = vrot.slane %v937, %v1000
        %v1003 = vunpack.c.l.s4 1983009808
        %v1004 = vunpack.c.0.s8 %v1003
        %v1005 = vlaneseq
        %v1006 = vshrl.u32 %v1005, 7
        %v1007 = vsub.s32 %v1004, %v1006
        %v1008 = vrot.slane %v994, %v1007
        %v1009 = vcombine.high %v1001, 0
        %v1011 = vunpack.c.l.s4 1934713408
        %v1012 = vunpack.c.0.s8 %v1011
        %v1013 = vlaneseq
        %v1014 = vshrl.u32 %v1013, 7
        %v1015 = vsub.s32 %v1012, %v1014
        %v1016 = vrot.slane %v1001, %v1015
        %v1018 = vunpack.c.l.s4 1934713408
        %v1019 = vunpack.c.0.s8 %v1018
        %v1020 = vlaneseq
        %v1021 = vshrl.u32 %v1020, 7
        %v1022 = vsub.s32 %v1019, %v1021
        %v1023 = vrot.slane %v1009, %v1022
        %v1024 = vcombine.high %v1008, 0
        %v1026 = vunpack.c.l.s4 1934713408
        %v1027 = vunpack.c.0.s8 %v1026
        %v1028 = vlaneseq
        %v1029 = vshrl.u32 %v1028, 7
        %v1030 = vsub.s32 %v1027, %v1029
        %v1031 = vrot.slane %v1008, %v1030
        %v1033 = vunpack.c.l.s4 1934713408
        %v1034 = vunpack.c.0.s8 %v1033
        %v1035 = vlaneseq
        %v1036 = vshrl.u32 %v1035, 7
        %v1037 = vsub.s32 %v1034, %v1036
        %v1038 = vrot.slane %v1024, %v1037
        %v1039 = vcombine.high %v1016, 0
        %v1040 = vcombine.high %v1023, 0
        %v1041 = vcombine.high %v1031, 0
        %v1042 = vcombine.high %v1038, 0
        %v1043 = vcombine.low %v967, %v974
        %v1045 = vunpack.c.l.s4 1983009808
        %v1046 = vunpack.c.0.s8 %v1045
        %v1047 = vlaneseq
        %v1048 = vshrl.u32 %v1047, 7
        %v1049 = vsub.s32 %v1046, %v1048
        %v1050 = vrot.slane %v1043, %v1049
        %v1051 = vcombine.low %v990, %v991
        %v1053 = vunpack.c.l.s4 1983009808
        %v1054 = vunpack.c.0.s8 %v1053
        %v1055 = vlaneseq
        %v1056 = vshrl.u32 %v1055, 7
        %v1057 = vsub.s32 %v1054, %v1056
        %v1058 = vrot.slane %v1051, %v1057
        %v1059 = vcombine.low %v982, %v989
        %v1061 = vunpack.c.l.s4 1983009808
        %v1062 = vunpack.c.0.s8 %v1061
        %v1063 = vlaneseq
        %v1064 = vshrl.u32 %v1063, 7
        %v1065 = vsub.s32 %v1062, %v1064
        %v1066 = vrot.slane %v1059, %v1065
        %v1067 = vcombine.low %v992, %v993
        %v1069 = vunpack.c.l.s4 1983009808
        %v1070 = vunpack.c.0.s8 %v1069
        %v1071 = vlaneseq
        %v1072 = vshrl.u32 %v1071, 7
        %v1073 = vsub.s32 %v1070, %v1072
        %v1074 = vrot.slane %v1067, %v1073
        %v1075 = vcombine.low %v1050, %v1058
        %v1077 = vunpack.c.l.s4 1934713408
        %v1078 = vunpack.c.0.s8 %v1077
        %v1079 = vlaneseq
        %v1080 = vshrl.u32 %v1079, 7
        %v1081 = vsub.s32 %v1078, %v1080
        %v1082 = vrot.slane %v1075, %v1081
        %v1083 = vcombine.low %v1066, %v1074
        %v1085 = vunpack.c.l.s4 1934713408
        %v1086 = vunpack.c.0.s8 %v1085
        %v1087 = vlaneseq
        %v1088 = vshrl.u32 %v1087, 7
        %v1089 = vsub.s32 %v1086, %v1088
        %v1090 = vrot.slane %v1083, %v1089
        %v1091 = vcombine.low %v1082, %v1090
        %v1092 = vcombine.low %v1016, %v1023
        %v1094 = vunpack.c.l.s4 1983009808
        %v1095 = vunpack.c.0.s8 %v1094
        %v1096 = vlaneseq
        %v1097 = vshrl.u32 %v1096, 7
        %v1098 = vsub.s32 %v1095, %v1097
        %v1099 = vrot.slane %v1092, %v1098
        %v1100 = vcombine.low %v1039, %v1040
        %v1102 = vunpack.c.l.s4 1983009808
        %v1103 = vunpack.c.0.s8 %v1102
        %v1104 = vlaneseq
        %v1105 = vshrl.u32 %v1104, 7
        %v1106 = vsub.s32 %v1103, %v1105
        %v1107 = vrot.slane %v1100, %v1106
        %v1108 = vcombine.low %v1031, %v1038
        %v1110 = vunpack.c.l.s4 1983009808
        %v1111 = vunpack.c.0.s8 %v1110
        %v1112 = vlaneseq
        %v1113 = vshrl.u32 %v1112, 7
        %v1114 = vsub.s32 %v1111, %v1113
        %v1115 = vrot.slane %v1108, %v1114
        %v1116 = vcombine.low %v1041, %v1042
        %v1118 = vunpack.c.l.s4 1983009808
        %v1119 = vunpack.c.0.s8 %v1118
        %v1120 = vlaneseq
        %v1121 = vshrl.u32 %v1120, 7
        %v1122 = vsub.s32 %v1119, %v1121
        %v1123 = vrot.slane %v1116, %v1122
        %v1124 = vcombine.low %v1099, %v1107
        %v1126 = vunpack.c.l.s4 1934713408
        %v1127 = vunpack.c.0.s8 %v1126
        %v1128 = vlaneseq
        %v1129 = vshrl.u32 %v1128, 7
        %v1130 = vsub.s32 %v1127, %v1129
        %v1131 = vrot.slane %v1124, %v1130
        %v1132 = vcombine.low %v1115, %v1123
        %v1134 = vunpack.c.l.s4 1934713408
        %v1135 = vunpack.c.0.s8 %v1134
        %v1136 = vlaneseq
        %v1137 = vshrl.u32 %v1136, 7
        %v1138 = vsub.s32 %v1135, %v1137
        %v1139 = vrot.slane %v1132, %v1138
        %v1140 = vcombine.low %v1131, %v1139
        %v1143 = vpack.i.b16 %v1140, %v1091
        %v1144 = vshrl.u32 %v1091, 16
        %v1145 = vshrl.u32 %v1140, 16
        %v1146 = vpack.i.b16 %v1145, %v1144
        %1148 = vrot.lane.b32.xlu0 %v926, 64
        %v1149 = vpop.permute.xlu0 %1148
        %v1152 = vpack.i.b16 %v1149, %v926
        %v1154 = vshrl.u32 %v926, 16
        %v1155 = vshrl.u32 %v1149, 16
        %v1156 = vpack.i.b16 %v1155, %v1154
        %v1158 = vcombine.high %v1152, %v940
        %v1160 = vunpack.c.l.s4 1983009808
        %v1161 = vunpack.c.0.s8 %v1160
        %v1162 = vlaneseq
        %v1163 = vshrl.u32 %v1162, 7
        %v1164 = vsub.s32 %v1161, %v1163
        %v1165 = vrot.slane %v1152, %v1164
        %v1167 = vunpack.c.l.s4 1983009808
        %v1168 = vunpack.c.0.s8 %v1167
        %v1169 = vlaneseq
        %v1170 = vshrl.u32 %v1169, 7
        %v1171 = vsub.s32 %v1168, %v1170
        %v1172 = vrot.slane %v1158, %v1171
        %v1173 = vcombine.high %v1165, 0
        %v1175 = vunpack.c.l.s4 1934713408
        %v1176 = vunpack.c.0.s8 %v1175
        %v1177 = vlaneseq
        %v1178 = vshrl.u32 %v1177, 7
        %v1179 = vsub.s32 %v1176, %v1178
        %v1180 = vrot.slane %v1165, %v1179
        %v1182 = vunpack.c.l.s4 1934713408
        %v1183 = vunpack.c.0.s8 %v1182
        %v1184 = vlaneseq
        %v1185 = vshrl.u32 %v1184, 7
        %v1186 = vsub.s32 %v1183, %v1185
        %v1187 = vrot.slane %v1173, %v1186
        %v1188 = vcombine.high %v1172, 0
        %v1190 = vunpack.c.l.s4 1934713408
        %v1191 = vunpack.c.0.s8 %v1190
        %v1192 = vlaneseq
        %v1193 = vshrl.u32 %v1192, 7
        %v1194 = vsub.s32 %v1191, %v1193
        %v1195 = vrot.slane %v1172, %v1194
        %v1197 = vunpack.c.l.s4 1934713408
        %v1198 = vunpack.c.0.s8 %v1197
        %v1199 = vlaneseq
        %v1200 = vshrl.u32 %v1199, 7
        %v1201 = vsub.s32 %v1198, %v1200
        %v1202 = vrot.slane %v1188, %v1201
        %v1203 = vcombine.high %v1180, 0
        %v1204 = vcombine.high %v1187, 0
        %v1205 = vcombine.high %v1195, 0
        %v1206 = vcombine.high %v1202, 0
        %v1207 = vcombine.high %v1156, %v943
        %v1209 = vunpack.c.l.s4 1983009808
        %v1210 = vunpack.c.0.s8 %v1209
        %v1211 = vlaneseq
        %v1212 = vshrl.u32 %v1211, 7
        %v1213 = vsub.s32 %v1210, %v1212
        %v1214 = vrot.slane %v1156, %v1213
        %v1216 = vunpack.c.l.s4 1983009808
        %v1217 = vunpack.c.0.s8 %v1216
        %v1218 = vlaneseq
        %v1219 = vshrl.u32 %v1218, 7
        %v1220 = vsub.s32 %v1217, %v1219
        %v1221 = vrot.slane %v1207, %v1220
        %v1222 = vcombine.high %v1214, 0
        %v1224 = vunpack.c.l.s4 1934713408
        %v1225 = vunpack.c.0.s8 %v1224
        %v1226 = vlaneseq
        %v1227 = vshrl.u32 %v1226, 7
        %v1228 = vsub.s32 %v1225, %v1227
        %v1229 = vrot.slane %v1214, %v1228
        %v1231 = vunpack.c.l.s4 1934713408
        %v1232 = vunpack.c.0.s8 %v1231
        %v1233 = vlaneseq
        %v1234 = vshrl.u32 %v1233, 7
        %v1235 = vsub.s32 %v1232, %v1234
        %v1236 = vrot.slane %v1222, %v1235
        %v1237 = vcombine.high %v1221, 0
        %v1239 = vunpack.c.l.s4 1934713408
        %v1240 = vunpack.c.0.s8 %v1239
        %v1241 = vlaneseq
        %v1242 = vshrl.u32 %v1241, 7
        %v1243 = vsub.s32 %v1240, %v1242
        %v1244 = vrot.slane %v1221, %v1243
        %v1246 = vunpack.c.l.s4 1934713408
        %v1247 = vunpack.c.0.s8 %v1246
        %v1248 = vlaneseq
        %v1249 = vshrl.u32 %v1248, 7
        %v1250 = vsub.s32 %v1247, %v1249
        %v1251 = vrot.slane %v1237, %v1250
        %v1252 = vcombine.high %v1229, 0
        %v1253 = vcombine.high %v1236, 0
        %v1254 = vcombine.high %v1244, 0
        %v1255 = vcombine.high %v1251, 0
        %v1256 = vcombine.low %v1180, %v1187
        %v1258 = vunpack.c.l.s4 1983009808
        %v1259 = vunpack.c.0.s8 %v1258
        %v1260 = vlaneseq
        %v1261 = vshrl.u32 %v1260, 7
        %v1262 = vsub.s32 %v1259, %v1261
        %v1263 = vrot.slane %v1256, %v1262
        %v1264 = vcombine.low %v1203, %v1204
        %v1266 = vunpack.c.l.s4 1983009808
        %v1267 = vunpack.c.0.s8 %v1266
        %v1268 = vlaneseq
        %v1269 = vshrl.u32 %v1268, 7
        %v1270 = vsub.s32 %v1267, %v1269
        %v1271 = vrot.slane %v1264, %v1270
        %v1272 = vcombine.low %v1195, %v1202
        %v1274 = vunpack.c.l.s4 1983009808
        %v1275 = vunpack.c.0.s8 %v1274
        %v1276 = vlaneseq
        %v1277 = vshrl.u32 %v1276, 7
        %v1278 = vsub.s32 %v1275, %v1277
        %v1279 = vrot.slane %v1272, %v1278
        %v1280 = vcombine.low %v1205, %v1206
        %v1282 = vunpack.c.l.s4 1983009808
        %v1283 = vunpack.c.0.s8 %v1282
        %v1284 = vlaneseq
        %v1285 = vshrl.u32 %v1284, 7
        %v1286 = vsub.s32 %v1283, %v1285
        %v1287 = vrot.slane %v1280, %v1286
        %v1288 = vcombine.low %v1263, %v1271
        %v1290 = vunpack.c.l.s4 1934713408
        %v1291 = vunpack.c.0.s8 %v1290
        %v1292 = vlaneseq
        %v1293 = vshrl.u32 %v1292, 7
        %v1294 = vsub.s32 %v1291, %v1293
        %v1295 = vrot.slane %v1288, %v1294
        %v1296 = vcombine.low %v1279, %v1287
        %v1298 = vunpack.c.l.s4 1934713408
        %v1299 = vunpack.c.0.s8 %v1298
        %v1300 = vlaneseq
        %v1301 = vshrl.u32 %v1300, 7
        %v1302 = vsub.s32 %v1299, %v1301
        %v1303 = vrot.slane %v1296, %v1302
        %v1304 = vcombine.low %v1295, %v1303
        %v1305 = vcombine.low %v1229, %v1236
        %v1307 = vunpack.c.l.s4 1983009808
        %v1308 = vunpack.c.0.s8 %v1307
        %v1309 = vlaneseq
        %v1310 = vshrl.u32 %v1309, 7
        %v1311 = vsub.s32 %v1308, %v1310
        %v1312 = vrot.slane %v1305, %v1311
        %v1313 = vcombine.low %v1252, %v1253
        %v1315 = vunpack.c.l.s4 1983009808
        %v1316 = vunpack.c.0.s8 %v1315
        %v1317 = vlaneseq
        %v1318 = vshrl.u32 %v1317, 7
        %v1319 = vsub.s32 %v1316, %v1318
        %v1320 = vrot.slane %v1313, %v1319
        %v1321 = vcombine.low %v1244, %v1251
        %v1323 = vunpack.c.l.s4 1983009808
        %v1324 = vunpack.c.0.s8 %v1323
        %v1325 = vlaneseq
        %v1326 = vshrl.u32 %v1325, 7
        %v1327 = vsub.s32 %v1324, %v1326
        %v1328 = vrot.slane %v1321, %v1327
        %v1329 = vcombine.low %v1254, %v1255
        %v1331 = vunpack.c.l.s4 1983009808
        %v1332 = vunpack.c.0.s8 %v1331
        %v1333 = vlaneseq
        %v1334 = vshrl.u32 %v1333, 7
        %v1335 = vsub.s32 %v1332, %v1334
        %v1336 = vrot.slane %v1329, %v1335
        %v1337 = vcombine.low %v1312, %v1320
        %v1339 = vunpack.c.l.s4 1934713408
        %v1340 = vunpack.c.0.s8 %v1339
        %v1341 = vlaneseq
        %v1342 = vshrl.u32 %v1341, 7
        %v1343 = vsub.s32 %v1340, %v1342
        %v1344 = vrot.slane %v1337, %v1343
        %v1345 = vcombine.low %v1328, %v1336
        %v1347 = vunpack.c.l.s4 1934713408
        %v1348 = vunpack.c.0.s8 %v1347
        %v1349 = vlaneseq
        %v1350 = vshrl.u32 %v1349, 7
        %v1351 = vsub.s32 %v1348, %v1350
        %v1352 = vrot.slane %v1345, %v1351
        %v1353 = vcombine.low %v1344, %v1352
        %v1356 = vpack.i.b16 %v1353, %v1304
        %v1357 = vshrl.u32 %v1304, 16
        %v1358 = vshrl.u32 %v1353, 16
        %v1359 = vpack.i.b16 %v1358, %v1357
        %1361 = vrot.lane.b32.xlu0 %v927, 64
        %v1362 = vpop.permute.xlu0 %1361
        %v1365 = vpack.i.b16 %v1362, %v927
        %v1367 = vshrl.u32 %v927, 16
        %v1368 = vshrl.u32 %v1362, 16
        %v1369 = vpack.i.b16 %v1368, %v1367
        %v1371 = vcombine.high %v1365, %v940
        %v1373 = vunpack.c.l.s4 1983009808
        %v1374 = vunpack.c.0.s8 %v1373
        %v1375 = vlaneseq
        %v1376 = vshrl.u32 %v1375, 7
        %v1377 = vsub.s32 %v1374, %v1376
        %v1378 = vrot.slane %v1365, %v1377
        %v1380 = vunpack.c.l.s4 1983009808
        %v1381 = vunpack.c.0.s8 %v1380
        %v1382 = vlaneseq
        %v1383 = vshrl.u32 %v1382, 7
        %v1384 = vsub.s32 %v1381, %v1383
        %v1385 = vrot.slane %v1371, %v1384
        %v1386 = vcombine.high %v1378, 0
        %v1388 = vunpack.c.l.s4 1934713408
        %v1389 = vunpack.c.0.s8 %v1388
        %v1390 = vlaneseq
        %v1391 = vshrl.u32 %v1390, 7
        %v1392 = vsub.s32 %v1389, %v1391
        %v1393 = vrot.slane %v1378, %v1392
        %v1395 = vunpack.c.l.s4 1934713408
        %v1396 = vunpack.c.0.s8 %v1395
        %v1397 = vlaneseq
        %v1398 = vshrl.u32 %v1397, 7
        %v1399 = vsub.s32 %v1396, %v1398
        %v1400 = vrot.slane %v1386, %v1399
        %v1401 = vcombine.high %v1385, 0
        %v1403 = vunpack.c.l.s4 1934713408
        %v1404 = vunpack.c.0.s8 %v1403
        %v1405 = vlaneseq
        %v1406 = vshrl.u32 %v1405, 7
        %v1407 = vsub.s32 %v1404, %v1406
        %v1408 = vrot.slane %v1385, %v1407
        %v1410 = vunpack.c.l.s4 1934713408
        %v1411 = vunpack.c.0.s8 %v1410
        %v1412 = vlaneseq
        %v1413 = vshrl.u32 %v1412, 7
        %v1414 = vsub.s32 %v1411, %v1413
        %v1415 = vrot.slane %v1401, %v1414
        %v1416 = vcombine.high %v1393, 0
        %v1417 = vcombine.high %v1400, 0
        %v1418 = vcombine.high %v1408, 0
        %v1419 = vcombine.high %v1415, 0
        %v1420 = vcombine.high %v1369, %v943
        %v1422 = vunpack.c.l.s4 1983009808
        %v1423 = vunpack.c.0.s8 %v1422
        %v1424 = vlaneseq
        %v1425 = vshrl.u32 %v1424, 7
        %v1426 = vsub.s32 %v1423, %v1425
        %v1427 = vrot.slane %v1369, %v1426
        %v1429 = vunpack.c.l.s4 1983009808
        %v1430 = vunpack.c.0.s8 %v1429
        %v1431 = vlaneseq
        %v1432 = vshrl.u32 %v1431, 7
        %v1433 = vsub.s32 %v1430, %v1432
        %v1434 = vrot.slane %v1420, %v1433
        %v1435 = vcombine.high %v1427, 0
        %v1437 = vunpack.c.l.s4 1934713408
        %v1438 = vunpack.c.0.s8 %v1437
        %v1439 = vlaneseq
        %v1440 = vshrl.u32 %v1439, 7
        %v1441 = vsub.s32 %v1438, %v1440
        %v1442 = vrot.slane %v1427, %v1441
        %v1444 = vunpack.c.l.s4 1934713408
        %v1445 = vunpack.c.0.s8 %v1444
        %v1446 = vlaneseq
        %v1447 = vshrl.u32 %v1446, 7
        %v1448 = vsub.s32 %v1445, %v1447
        %v1449 = vrot.slane %v1435, %v1448
        %v1450 = vcombine.high %v1434, 0
        %v1452 = vunpack.c.l.s4 1934713408
        %v1453 = vunpack.c.0.s8 %v1452
        %v1454 = vlaneseq
        %v1455 = vshrl.u32 %v1454, 7
        %v1456 = vsub.s32 %v1453, %v1455
        %v1457 = vrot.slane %v1434, %v1456
        %v1459 = vunpack.c.l.s4 1934713408
        %v1460 = vunpack.c.0.s8 %v1459
        %v1461 = vlaneseq
        %v1462 = vshrl.u32 %v1461, 7
        %v1463 = vsub.s32 %v1460, %v1462
        %v1464 = vrot.slane %v1450, %v1463
        %v1465 = vcombine.high %v1442, 0
        %v1466 = vcombine.high %v1449, 0
        %v1467 = vcombine.high %v1457, 0
        %v1468 = vcombine.high %v1464, 0
        %v1469 = vcombine.low %v1393, %v1400
        %v1471 = vunpack.c.l.s4 1983009808
        %v1472 = vunpack.c.0.s8 %v1471
        %v1473 = vlaneseq
        %v1474 = vshrl.u32 %v1473, 7
        %v1475 = vsub.s32 %v1472, %v1474
        %v1476 = vrot.slane %v1469, %v1475
        %v1477 = vcombine.low %v1416, %v1417
        %v1479 = vunpack.c.l.s4 1983009808
        %v1480 = vunpack.c.0.s8 %v1479
        %v1481 = vlaneseq
        %v1482 = vshrl.u32 %v1481, 7
        %v1483 = vsub.s32 %v1480, %v1482
        %v1484 = vrot.slane %v1477, %v1483
        %v1485 = vcombine.low %v1408, %v1415
        %v1487 = vunpack.c.l.s4 1983009808
        %v1488 = vunpack.c.0.s8 %v1487
        %v1489 = vlaneseq
        %v1490 = vshrl.u32 %v1489, 7
        %v1491 = vsub.s32 %v1488, %v1490
        %v1492 = vrot.slane %v1485, %v1491
        %v1493 = vcombine.low %v1418, %v1419
        %v1495 = vunpack.c.l.s4 1983009808
        %v1496 = vunpack.c.0.s8 %v1495
        %v1497 = vlaneseq
        %v1498 = vshrl.u32 %v1497, 7
        %v1499 = vsub.s32 %v1496, %v1498
        %v1500 = vrot.slane %v1493, %v1499
        %v1501 = vcombine.low %v1476, %v1484
        %v1503 = vunpack.c.l.s4 1934713408
        %v1504 = vunpack.c.0.s8 %v1503
        %v1505 = vlaneseq
        %v1506 = vshrl.u32 %v1505, 7
        %v1507 = vsub.s32 %v1504, %v1506
        %v1508 = vrot.slane %v1501, %v1507
        %v1509 = vcombine.low %v1492, %v1500
        %v1511 = vunpack.c.l.s4 1934713408
        %v1512 = vunpack.c.0.s8 %v1511
        %v1513 = vlaneseq
        %v1514 = vshrl.u32 %v1513, 7
        %v1515 = vsub.s32 %v1512, %v1514
        %v1516 = vrot.slane %v1509, %v1515
        %v1517 = vcombine.low %v1508, %v1516
        %v1518 = vcombine.low %v1442, %v1449
        %v1520 = vunpack.c.l.s4 1983009808
        %v1521 = vunpack.c.0.s8 %v1520
        %v1522 = vlaneseq
        %v1523 = vshrl.u32 %v1522, 7
        %v1524 = vsub.s32 %v1521, %v1523
        %v1525 = vrot.slane %v1518, %v1524
        %v1526 = vcombine.low %v1465, %v1466
        %v1528 = vunpack.c.l.s4 1983009808
        %v1529 = vunpack.c.0.s8 %v1528
        %v1530 = vlaneseq
        %v1531 = vshrl.u32 %v1530, 7
        %v1532 = vsub.s32 %v1529, %v1531
        %v1533 = vrot.slane %v1526, %v1532
        %v1534 = vcombine.low %v1457, %v1464
        %v1536 = vunpack.c.l.s4 1983009808
        %v1537 = vunpack.c.0.s8 %v1536
        %v1538 = vlaneseq
        %v1539 = vshrl.u32 %v1538, 7
        %v1540 = vsub.s32 %v1537, %v1539
        %v1541 = vrot.slane %v1534, %v1540
        %v1542 = vcombine.low %v1467, %v1468
        %v1544 = vunpack.c.l.s4 1983009808
        %v1545 = vunpack.c.0.s8 %v1544
        %v1546 = vlaneseq
        %v1547 = vshrl.u32 %v1546, 7
        %v1548 = vsub.s32 %v1545, %v1547
        %v1549 = vrot.slane %v1542, %v1548
        %v1550 = vcombine.low %v1525, %v1533
        %v1552 = vunpack.c.l.s4 1934713408
        %v1553 = vunpack.c.0.s8 %v1552
        %v1554 = vlaneseq
        %v1555 = vshrl.u32 %v1554, 7
        %v1556 = vsub.s32 %v1553, %v1555
        %v1557 = vrot.slane %v1550, %v1556
        %v1558 = vcombine.low %v1541, %v1549
        %v1560 = vunpack.c.l.s4 1934713408
        %v1561 = vunpack.c.0.s8 %v1560
        %v1562 = vlaneseq
        %v1563 = vshrl.u32 %v1562, 7
        %v1564 = vsub.s32 %v1561, %v1563
        %v1565 = vrot.slane %v1558, %v1564
        %v1566 = vcombine.low %v1557, %v1565
        %v1569 = vpack.i.b16 %v1566, %v1517
        %v1571 = vshrl.u32 %v1517, 16
        %v1572 = vshrl.u32 %v1566, 16
        %v1573 = vpack.i.b16 %v1572, %v1571
        %vm1575 = vcmask 523264
        %v1577 = vsel %vm1575, %v1143, 0
        %v1580 = vsel %vm1575, %v1356, 0
        %1582 = vmatprep.subr.bf16.mxu0 0
        %1583 = vmatpush1.bf16.xpose.msra.mxu0 %v1580
        %1584 = vmatprep.subr.bf16.mxu0 0
        %1585 = vmatpush1.bf16.xpose.msra.mxu0 0
        %1586 = vmatprep.subr.bf16.mxu0 0
        %1587 = vmatpush1.bf16.xpose.msra.mxu0 0
        %1588 = vmatprep.subr.bf16.mxu0 0
        %1589 = vmatpush1.bf16.xpose.msra.mxu0 0
        %1590 = vmatprep.subr.bf16.mxu0 0
        %1591 = vmatpush1.bf16.xpose.msra.mxu0 0
        %1592 = vmatprep.subr.bf16.mxu0 0
        %1593 = vmatpush1.bf16.xpose.msra.mxu0 0
        %1594 = vmatprep.subr.bf16.mxu0 0
        %1595 = vmatpush1.bf16.xpose.msra.mxu0 0
        %1596 = vmatprep.subr.bf16.mxu0 0
        %1597 = vmatpush1.bf16.xpose.msra.mxu0 0
        %1598 = vmatprep.subr.bf16.mxu0 0
        %1599 = vmatpush1.bf16.xpose.msra.mxu0 0
        %1600 = vmatprep.subr.bf16.mxu0 0
        %1601 = vmatpush1.bf16.xpose.msra.mxu0 0
        %1602 = vmatprep.subr.bf16.mxu0 0
        %1603 = vmatpush1.bf16.xpose.msra.mxu0 0
        %1604 = vmatprep.subr.bf16.mxu0 0
        %1605 = vmatpush1.bf16.xpose.msra.mxu0 0
        %1606 = vmatprep.subr.bf16.mxu0 0
        %1607 = vmatpush1.bf16.xpose.msra.mxu0 0
        %1608 = vmatprep.subr.bf16.mxu0 0
        %1609 = vmatpush1.bf16.xpose.msra.mxu0 0
        %1610 = vmatprep.subr.bf16.mxu0 0
        %1611 = vmatpush1.bf16.xpose.msra.mxu0 0
        %1612 = vmatprep.subr.bf16.mxu0 0
        %1613 = vmatpush1.bf16.xpose.msra.mxu0 0
        %1614 = vmatprep.mubr.bf16.mxu0 0
        %1615 = vmatmul.mubr.bf16.gmra.mrb[0].mxu0 %v1577
        %v1616 = vpop.f32.mrb[0].mxu0
        %v1617 = vadd.f32 0.0, %v1616
        %v1618 = vpop.f32.mrb[0].mxu0
        %v1619 = vpop.f32.mrb[0].mxu0
        %v1620 = vadd.f32 0.0, %v1619
        %v1621 = vpop.f32.mrb[0].mxu0
        %1622 = vdwg.mxu0
        %v1624 = vsel %vm1575, %v1146, 0
        %v1627 = vsel %vm1575, %v1359, 0
        %1629 = vmatprep.subr.bf16.mxu0 0
        %1630 = vmatpush1.bf16.xpose.msra.mxu0 %v1627
        %1631 = vmatprep.subr.bf16.mxu0 0
        %1632 = vmatpush1.bf16.xpose.msra.mxu0 0
        %1633 = vmatprep.subr.bf16.mxu0 0
        %1634 = vmatpush1.bf16.xpose.msra.mxu0 0
        %1635 = vmatprep.subr.bf16.mxu0 0
        %1636 = vmatpush1.bf16.xpose.msra.mxu0 0
        %1637 = vmatprep.subr.bf16.mxu0 0
        %1638 = vmatpush1.bf16.xpose.msra.mxu0 0
        %1639 = vmatprep.subr.bf16.mxu0 0
        %1640 = vmatpush1.bf16.xpose.msra.mxu0 0
        %1641 = vmatprep.subr.bf16.mxu0 0
        %1642 = vmatpush1.bf16.xpose.msra.mxu0 0
        %1643 = vmatprep.subr.bf16.mxu0 0
        %1644 = vmatpush1.bf16.xpose.msra.mxu0 0
        %1645 = vmatprep.subr.bf16.mxu0 0
        %1646 = vmatpush1.bf16.xpose.msra.mxu0 0
        %1647 = vmatprep.subr.bf16.mxu0 0
        %1648 = vmatpush1.bf16.xpose.msra.mxu0 0
        %1649 = vmatprep.subr.bf16.mxu0 0
        %1650 = vmatpush1.bf16.xpose.msra.mxu0 0
        %1651 = vmatprep.subr.bf16.mxu0 0
        %1652 = vmatpush1.bf16.xpose.msra.mxu0 0
        %1653 = vmatprep.subr.bf16.mxu0 0
        %1654 = vmatpush1.bf16.xpose.msra.mxu0 0
        %1655 = vmatprep.subr.bf16.mxu0 0
        %1656 = vmatpush1.bf16.xpose.msra.mxu0 0
        %1657 = vmatprep.subr.bf16.mxu0 0
        %1658 = vmatpush1.bf16.xpose.msra.mxu0 0
        %1659 = vmatprep.subr.bf16.mxu0 0
        %1660 = vmatpush1.bf16.xpose.msra.mxu0 0
        %1661 = vmatprep.mubr.bf16.mxu0 0
        %1662 = vmatmul.mubr.bf16.gmra.mrb[0].mxu0 %v1624
        %v1663 = vpop.f32.mrb[0].mxu0
        %v1664 = vadd.f32 0.0, %v1663
        %v1665 = vpop.f32.mrb[0].mxu0
        %v1666 = vpop.f32.mrb[0].mxu0
        %v1667 = vadd.f32 0.0, %v1666
        %v1668 = vpop.f32.mrb[0].mxu0
        %1669 = vdwg.mxu0
        %vm1670 = vcmask 130048
        %v1671 = vsel %vm1670, %v1617, -inf
        %1672 = vmax.xlane.f32.xlu0 %v1671
        %v1673 = vpop.xlane.xlu0 %1672
        %v1674 = vsel %vm1670, %v1620, -inf
        %1675 = vmax.xlane.f32.xlu0 %v1674
        %v1676 = vpop.xlane.xlu0 %1675
        %v1677 = vsel %vm1670, %v1664, -inf
        %1678 = vmax.xlane.f32.xlu0 %v1677
        %v1679 = vpop.xlane.xlu0 %1678
        %v1680 = vsel %vm1670, %v1667, -inf
        %1681 = vmax.xlane.f32.xlu0 %v1680
        %v1682 = vpop.xlane.xlu0 %1681
        %v1683 = vsub.f32 %v1617, %v1673
        %v1684 = vsub.f32 %v1620, %v1676
        %v1685 = vsub.f32 %v1664, %v1679
        %v1686 = vsub.f32 %v1667, %v1682
        %v1687 = vmul.f32 %v1683, 1.442695
        %v1688 = vpow.pop %v1687
        %v1689 = vmul.f32 %v1684, 1.442695
        %v1690 = vpow.pop %v1689
        %v1691 = vmul.f32 %v1685, 1.442695
        %v1692 = vpow.pop %v1691
        %v1693 = vmul.f32 %v1686, 1.442695
        %v1694 = vpow.pop %v1693
        %v1695 = vsel %vm1670, %v1688, 0.0
        %1696 = vadd.xlane.f32.xlu0 %v1695
        %v1697 = vpop.xlane.xlu0 %1696
        %v1698 = vsel %vm1670, %v1690, 0.0
        %1699 = vadd.xlane.f32.xlu0 %v1698
        %v1700 = vpop.xlane.xlu0 %1699
        %v1701 = vsel %vm1670, %v1692, 0.0
        %1702 = vadd.xlane.f32.xlu0 %v1701
        %v1703 = vpop.xlane.xlu0 %1702
        %v1704 = vsel %vm1670, %v1694, 0.0
        %1705 = vadd.xlane.f32.xlu0 %v1704
        %v1706 = vpop.xlane.xlu0 %1705
        %v1707 = vrcp.pop %v1697
        %v1708 = vrcp.pop %v1700
        %v1709 = vrcp.pop %v1703
        %v1710 = vrcp.pop %v1706
        %v1711 = vmul.f32 %v1688, %v1707
        %v1712 = vmul.f32 %v1690, %v1708
        %v1713 = vmul.f32 %v1692, %v1709
        %v1714 = vmul.f32 %v1694, %v1710
        %v1715 = vpack.c.bf16 %v1712, %v1711
        %v1716 = vpack.c.bf16 %v1714, %v1713
        %v1718 = vsel %vm1670, %v1715, 0
        %1720 = vmatprep.subr.bf16.mxu0 0
        %1721 = vmatpush1.bf16.msra.mxu0 %v1569
        %1722 = vmatprep.subr.bf16.mxu0 0
        %1723 = vmatpush1.bf16.msra.mxu0 0
        %1724 = vmatprep.subr.bf16.mxu0 0
        %1725 = vmatpush1.bf16.msra.mxu0 0
        %1726 = vmatprep.subr.bf16.mxu0 0
        %1727 = vmatpush1.bf16.msra.mxu0 0
        %1728 = vmatprep.subr.bf16.mxu0 0
        %1729 = vmatpush1.bf16.msra.mxu0 0
        %1730 = vmatprep.subr.bf16.mxu0 0
        %1731 = vmatpush1.bf16.msra.mxu0 0
        %1732 = vmatprep.subr.bf16.mxu0 0
        %1733 = vmatpush1.bf16.msra.mxu0 0
        %1734 = vmatprep.subr.bf16.mxu0 0
        %1735 = vmatpush1.bf16.msra.mxu0 0
        %1736 = vmatprep.subr.bf16.mxu0 0
        %1737 = vmatpush1.bf16.msra.mxu0 0
        %1738 = vmatprep.subr.bf16.mxu0 0
        %1739 = vmatpush1.bf16.msra.mxu0 0
        %1740 = vmatprep.subr.bf16.mxu0 0
        %1741 = vmatpush1.bf16.msra.mxu0 0
        %1742 = vmatprep.subr.bf16.mxu0 0
        %1743 = vmatpush1.bf16.msra.mxu0 0
        %1744 = vmatprep.subr.bf16.mxu0 0
        %1745 = vmatpush1.bf16.msra.mxu0 0
        %1746 = vmatprep.subr.bf16.mxu0 0
        %1747 = vmatpush1.bf16.msra.mxu0 0
        %1748 = vmatprep.subr.bf16.mxu0 0
        %1749 = vmatpush1.bf16.msra.mxu0 0
        %1750 = vmatprep.subr.bf16.mxu0 0
        %1751 = vmatpush1.bf16.msra.mxu0 0
        %1752 = vmatprep.mubr.bf16.mxu0 0
        %1753 = vmatmul.mubr.bf16.gmra.mrb[0].mxu0 %v1718
        %v1754 = vpop.f32.mrb[0].mxu0
        %v1755 = vadd.f32 0.0, %v1754
        %v1756 = vpop.f32.mrb[0].mxu0
        %v1757 = vpop.f32.mrb[0].mxu0
        %v1758 = vadd.f32 0.0, %v1757
        %v1759 = vpop.f32.mrb[0].mxu0
        %1760 = vdwg.mxu0
        %v1762 = vsel %vm1670, %v1716, 0
        %1764 = vmatprep.subr.bf16.mxu0 0
        %1765 = vmatpush1.bf16.msra.mxu0 %v1573
        %1766 = vmatprep.subr.bf16.mxu0 0
        %1767 = vmatpush1.bf16.msra.mxu0 0
        %1768 = vmatprep.subr.bf16.mxu0 0
        %1769 = vmatpush1.bf16.msra.mxu0 0
        %1770 = vmatprep.subr.bf16.mxu0 0
        %1771 = vmatpush1.bf16.msra.mxu0 0
        %1772 = vmatprep.subr.bf16.mxu0 0
        %1773 = vmatpush1.bf16.msra.mxu0 0
        %1774 = vmatprep.subr.bf16.mxu0 0
        %1775 = vmatpush1.bf16.msra.mxu0 0
        %1776 = vmatprep.subr.bf16.mxu0 0
        %1777 = vmatpush1.bf16.msra.mxu0 0
        %1778 = vmatprep.subr.bf16.mxu0 0
        %1779 = vmatpush1.bf16.msra.mxu0 0
        %1780 = vmatprep.subr.bf16.mxu0 0
        %1781 = vmatpush1.bf16.msra.mxu0 0
        %1782 = vmatprep.subr.bf16.mxu0 0
        %1783 = vmatpush1.bf16.msra.mxu0 0
        %1784 = vmatprep.subr.bf16.mxu0 0
        %1785 = vmatpush1.bf16.msra.mxu0 0
        %1786 = vmatprep.subr.bf16.mxu0 0
        %1787 = vmatpush1.bf16.msra.mxu0 0
        %1788 = vmatprep.subr.bf16.mxu0 0
        %1789 = vmatpush1.bf16.msra.mxu0 0
        %1790 = vmatprep.subr.bf16.mxu0 0
        %1791 = vmatpush1.bf16.msra.mxu0 0
        %1792 = vmatprep.subr.bf16.mxu0 0
        %1793 = vmatpush1.bf16.msra.mxu0 0
        %1794 = vmatprep.subr.bf16.mxu0 0
        %1795 = vmatpush1.bf16.msra.mxu0 0
        %1796 = vmatprep.mubr.bf16.mxu0 0
        %1797 = vmatmul.mubr.bf16.gmra.mrb[0].mxu0 %v1762
        %v1798 = vpop.f32.mrb[0].mxu0
        %v1799 = vadd.f32 0.0, %v1798
        %v1800 = vpop.f32.mrb[0].mxu0
        %v1801 = vpop.f32.mrb[0].mxu0
        %v1802 = vadd.f32 0.0, %v1801
        %v1803 = vpop.f32.mrb[0].mxu0
        %1804 = vdwg.mxu0
        %v1805 = vcombine.high %v1755, 0.0
        %v1807 = vunpack.c.l.s4 1983009808
        %v1808 = vunpack.c.0.s8 %v1807
        %v1809 = vlaneseq
        %v1810 = vshrl.u32 %v1809, 7
        %v1811 = vsub.s32 %v1808, %v1810
        %v1812 = vrot.slane %v1755, %v1811
        %v1814 = vunpack.c.l.s4 1983009808
        %v1815 = vunpack.c.0.s8 %v1814
        %v1816 = vlaneseq
        %v1817 = vshrl.u32 %v1816, 7
        %v1818 = vsub.s32 %v1815, %v1817
        %v1819 = vrot.slane %v1805, %v1818
        %v1820 = vcombine.high %v1799, 0.0
        %v1822 = vunpack.c.l.s4 1983009808
        %v1823 = vunpack.c.0.s8 %v1822
        %v1824 = vlaneseq
        %v1825 = vshrl.u32 %v1824, 7
        %v1826 = vsub.s32 %v1823, %v1825
        %v1827 = vrot.slane %v1799, %v1826
        %v1829 = vunpack.c.l.s4 1983009808
        %v1830 = vunpack.c.0.s8 %v1829
        %v1831 = vlaneseq
        %v1832 = vshrl.u32 %v1831, 7
        %v1833 = vsub.s32 %v1830, %v1832
        %v1834 = vrot.slane %v1820, %v1833
        %v1835 = vcombine.low %v1812, %v1827
        %v1836 = vcombine.high %v1812, %v1827
        %v1838 = vunpack.c.l.s4 1934713408
        %v1839 = vunpack.c.0.s8 %v1838
        %v1840 = vlaneseq
        %v1841 = vshrl.u32 %v1840, 7
        %v1842 = vsub.s32 %v1839, %v1841
        %v1843 = vrot.slane %v1835, %v1842
        %v1845 = vunpack.c.l.s4 1934713408
        %v1846 = vunpack.c.0.s8 %v1845
        %v1847 = vlaneseq
        %v1848 = vshrl.u32 %v1847, 7
        %v1849 = vsub.s32 %v1846, %v1848
        %v1850 = vrot.slane %v1836, %v1849
        %v1851 = vcombine.low %v1819, %v1834
        %v1852 = vcombine.high %v1819, %v1834
        %v1854 = vunpack.c.l.s4 1934713408
        %v1855 = vunpack.c.0.s8 %v1854
        %v1856 = vlaneseq
        %v1857 = vshrl.u32 %v1856, 7
        %v1858 = vsub.s32 %v1855, %v1857
        %v1859 = vrot.slane %v1851, %v1858
        %v1861 = vunpack.c.l.s4 1934713408
        %v1862 = vunpack.c.0.s8 %v1861
        %v1863 = vlaneseq
        %v1864 = vshrl.u32 %v1863, 7
        %v1865 = vsub.s32 %v1862, %v1864
        %v1866 = vrot.slane %v1852, %v1865
        %v1867 = vcombine.high %v1843, 0.0
        %v1868 = vcombine.high %v1850, 0.0
        %v1869 = vcombine.high %v1859, 0.0
        %v1870 = vcombine.high %v1866, 0.0
        %v1871 = vcombine.high %v1758, 0.0
        %v1873 = vunpack.c.l.s4 1983009808
        %v1874 = vunpack.c.0.s8 %v1873
        %v1875 = vlaneseq
        %v1876 = vshrl.u32 %v1875, 7
        %v1877 = vsub.s32 %v1874, %v1876
        %v1878 = vrot.slane %v1758, %v1877
        %v1880 = vunpack.c.l.s4 1983009808
        %v1881 = vunpack.c.0.s8 %v1880
        %v1882 = vlaneseq
        %v1883 = vshrl.u32 %v1882, 7
        %v1884 = vsub.s32 %v1881, %v1883
        %v1885 = vrot.slane %v1871, %v1884
        %v1886 = vcombine.high %v1802, 0.0
        %v1888 = vunpack.c.l.s4 1983009808
        %v1889 = vunpack.c.0.s8 %v1888
        %v1890 = vlaneseq
        %v1891 = vshrl.u32 %v1890, 7
        %v1892 = vsub.s32 %v1889, %v1891
        %v1893 = vrot.slane %v1802, %v1892
        %v1895 = vunpack.c.l.s4 1983009808
        %v1896 = vunpack.c.0.s8 %v1895
        %v1897 = vlaneseq
        %v1898 = vshrl.u32 %v1897, 7
        %v1899 = vsub.s32 %v1896, %v1898
        %v1900 = vrot.slane %v1886, %v1899
        %v1901 = vcombine.low %v1878, %v1893
        %v1902 = vcombine.high %v1878, %v1893
        %v1904 = vunpack.c.l.s4 1934713408
        %v1905 = vunpack.c.0.s8 %v1904
        %v1906 = vlaneseq
        %v1907 = vshrl.u32 %v1906, 7
        %v1908 = vsub.s32 %v1905, %v1907
        %v1909 = vrot.slane %v1901, %v1908
        %v1911 = vunpack.c.l.s4 1934713408
        %v1912 = vunpack.c.0.s8 %v1911
        %v1913 = vlaneseq
        %v1914 = vshrl.u32 %v1913, 7
        %v1915 = vsub.s32 %v1912, %v1914
        %v1916 = vrot.slane %v1902, %v1915
        %v1917 = vcombine.low %v1885, %v1900
        %v1918 = vcombine.high %v1885, %v1900
        %v1920 = vunpack.c.l.s4 1934713408
        %v1921 = vunpack.c.0.s8 %v1920
        %v1922 = vlaneseq
        %v1923 = vshrl.u32 %v1922, 7
        %v1924 = vsub.s32 %v1921, %v1923
        %v1925 = vrot.slane %v1917, %v1924
        %v1927 = vunpack.c.l.s4 1934713408
        %v1928 = vunpack.c.0.s8 %v1927
        %v1929 = vlaneseq
        %v1930 = vshrl.u32 %v1929, 7
        %v1931 = vsub.s32 %v1928, %v1930
        %v1932 = vrot.slane %v1918, %v1931
        %v1933 = vcombine.high %v1909, 0.0
        %v1934 = vcombine.high %v1916, 0.0
        %v1935 = vcombine.high %v1925, 0.0
        %v1936 = vcombine.high %v1932, 0.0
        %v1937 = vcombine.low %v1843, %v1850
        %v1939 = vunpack.c.l.s4 1983009808
        %v1940 = vunpack.c.0.s8 %v1939
        %v1941 = vlaneseq
        %v1942 = vshrl.u32 %v1941, 7
        %v1943 = vsub.s32 %v1940, %v1942
        %v1944 = vrot.slane %v1937, %v1943
        %v1945 = vcombine.low %v1867, %v1868
        %v1947 = vunpack.c.l.s4 1983009808
        %v1948 = vunpack.c.0.s8 %v1947
        %v1949 = vlaneseq
        %v1950 = vshrl.u32 %v1949, 7
        %v1951 = vsub.s32 %v1948, %v1950
        %v1952 = vrot.slane %v1945, %v1951
        %v1953 = vcombine.low %v1859, %v1866
        %v1955 = vunpack.c.l.s4 1983009808
        %v1956 = vunpack.c.0.s8 %v1955
        %v1957 = vlaneseq
        %v1958 = vshrl.u32 %v1957, 7
        %v1959 = vsub.s32 %v1956, %v1958
        %v1960 = vrot.slane %v1953, %v1959
        %v1961 = vcombine.low %v1869, %v1870
        %v1963 = vunpack.c.l.s4 1983009808
        %v1964 = vunpack.c.0.s8 %v1963
        %v1965 = vlaneseq
        %v1966 = vshrl.u32 %v1965, 7
        %v1967 = vsub.s32 %v1964, %v1966
        %v1968 = vrot.slane %v1961, %v1967
        %v1969 = vcombine.low %v1944, %v1952
        %v1971 = vunpack.c.l.s4 1934713408
        %v1972 = vunpack.c.0.s8 %v1971
        %v1973 = vlaneseq
        %v1974 = vshrl.u32 %v1973, 7
        %v1975 = vsub.s32 %v1972, %v1974
        %v1976 = vrot.slane %v1969, %v1975
        %v1977 = vcombine.low %v1960, %v1968
        %v1979 = vunpack.c.l.s4 1934713408
        %v1980 = vunpack.c.0.s8 %v1979
        %v1981 = vlaneseq
        %v1982 = vshrl.u32 %v1981, 7
        %v1983 = vsub.s32 %v1980, %v1982
        %v1984 = vrot.slane %v1977, %v1983
        %v1985 = vcombine.low %v1976, %v1984
        %v1986 = vcombine.high %v1976, %v1984
        %v1987 = vcombine.low %v1909, %v1916
        %v1989 = vunpack.c.l.s4 1983009808
        %v1990 = vunpack.c.0.s8 %v1989
        %v1991 = vlaneseq
        %v1992 = vshrl.u32 %v1991, 7
        %v1993 = vsub.s32 %v1990, %v1992
        %v1994 = vrot.slane %v1987, %v1993
        %v1995 = vcombine.low %v1933, %v1934
        %v1997 = vunpack.c.l.s4 1983009808
        %v1998 = vunpack.c.0.s8 %v1997
        %v1999 = vlaneseq
        %v2000 = vshrl.u32 %v1999, 7
        %v2001 = vsub.s32 %v1998, %v2000
        %v2002 = vrot.slane %v1995, %v2001
        %v2003 = vcombine.low %v1925, %v1932
        %v2005 = vunpack.c.l.s4 1983009808
        %v2006 = vunpack.c.0.s8 %v2005
        %v2007 = vlaneseq
        %v2008 = vshrl.u32 %v2007, 7
        %v2009 = vsub.s32 %v2006, %v2008
        %v2010 = vrot.slane %v2003, %v2009
        %v2011 = vcombine.low %v1935, %v1936
        %v2013 = vunpack.c.l.s4 1983009808
        %v2014 = vunpack.c.0.s8 %v2013
        %v2015 = vlaneseq
        %v2016 = vshrl.u32 %v2015, 7
        %v2017 = vsub.s32 %v2014, %v2016
        %v2018 = vrot.slane %v2011, %v2017
        %v2019 = vcombine.low %v1994, %v2002
        %v2021 = vunpack.c.l.s4 1934713408
        %v2022 = vunpack.c.0.s8 %v2021
        %v2023 = vlaneseq
        %v2024 = vshrl.u32 %v2023, 7
        %v2025 = vsub.s32 %v2022, %v2024
        %v2026 = vrot.slane %v2019, %v2025
        %v2027 = vcombine.low %v2010, %v2018
        %v2029 = vunpack.c.l.s4 1934713408
        %v2030 = vunpack.c.0.s8 %v2029
        %v2031 = vlaneseq
        %v2032 = vshrl.u32 %v2031, 7
        %v2033 = vsub.s32 %v2030, %v2032
        %v2034 = vrot.slane %v2027, %v2033
        %v2035 = vcombine.low %v2026, %v2034
        %v2036 = vcombine.high %v2026, %v2034
        %2039 = vrot.lane.b32.xlu0 %v1986, 64
        %v2040 = vpop.permute.xlu0 %2039
        %2041 = vrot.lane.b32.xlu0 %v2036, 64
        %v2042 = vpop.permute.xlu0 %2041
        %v2045 = vsel %vm1575, %v1985, %v2040
        %v2046 = vsel %vm1575, %v2035, %v2042
        %v2047 = vpack.c.bf16 %v2046, %v2045
        %v2048 = vld [vmem:[#allocation11] sm:$0xf]
        %v2049 = vld [vmem:[#allocation11 + $0x4] sm:$0xf]
        %v2050 = vld [vmem:[#allocation11 + $0x8] sm:$0xf]
        %v2051 = vld [vmem:[#allocation11 + $0xc] sm:$0xf]
        %v2052 = vld [vmem:[#allocation11 + $0x10] sm:$0xf]
        %v2053 = vld [vmem:[#allocation11 + $0x14] sm:$0xf]
        %v2054 = vld [vmem:[#allocation11 + $0x18] sm:$0xf]
        %v2055 = vld [vmem:[#allocation11 + $0x1c] sm:$0xf]
        %v2056 = vld [vmem:[#allocation11 + $0x20] sm:$0xf]
        %v2057 = vld [vmem:[#allocation11 + $0x24] sm:$0xf]
        %v2058 = vld [vmem:[#allocation11 + $0x28] sm:$0xf]
        %v2059 = vld [vmem:[#allocation11 + $0x2c] sm:$0xf]
        %v2060 = vld [vmem:[#allocation11 + $0x30] sm:$0xf]
        %v2061 = vld [vmem:[#allocation11 + $0x34] sm:$0xf]
        %v2062 = vld [vmem:[#allocation11 + $0x38] sm:$0xf]
        %v2063 = vld [vmem:[#allocation11 + $0x3c] sm:$0xf]
        %v2064 = vld [vmem:[#allocation13] sm:$0x1]
        %v2066 = vlaneseq
        %v2067 = vshrl.u32 %v2066, 7
        %v2068 = vsub.s32 0, %v2067
        %v2069 = vrot.slane %v2064, %v2068
        %v2087 = vunpack.c.l.b16 %v2048
        %v2088 = vunpack.c.l.b16 %v2049
        %v2089 = vunpack.c.l.b16 %v2050
        %v2090 = vunpack.c.l.b16 %v2051
        %v2091 = vunpack.c.l.b16 %v2052
        %v2092 = vunpack.c.l.b16 %v2053
        %v2093 = vunpack.c.l.b16 %v2054
        %v2094 = vunpack.c.l.b16 %v2055
        %v2095 = vunpack.c.l.b16 %v2056
        %v2096 = vunpack.c.l.b16 %v2057
        %v2097 = vunpack.c.l.b16 %v2058
        %v2098 = vunpack.c.l.b16 %v2059
        %v2099 = vunpack.c.l.b16 %v2060
        %v2100 = vunpack.c.l.b16 %v2061
        %v2101 = vunpack.c.l.b16 %v2062
        %v2102 = vunpack.c.l.b16 %v2063
        %v2103 = vpack.c.b16 %v2088, %v2087
        %v2104 = vpack.c.b16 %v2090, %v2089
        %v2105 = vpack.c.b16 %v2092, %v2091
        %v2106 = vpack.c.b16 %v2094, %v2093
        %v2107 = vpack.c.b16 %v2096, %v2095
        %v2108 = vpack.c.b16 %v2098, %v2097
        %v2109 = vpack.c.b16 %v2100, %v2099
        %v2110 = vpack.c.b16 %v2102, %v2101
        %2119 = vmatprep.subr.bf16.mxu0 0
        %2120 = vmatpush1.bf16.msra.mxu0 %v2103
        %2121 = vmatprep.subr.bf16.mxu0 0
        %2122 = vmatpush1.bf16.msra.mxu0 %v2104
        %2123 = vmatprep.subr.bf16.mxu0 0
        %2124 = vmatpush1.bf16.msra.mxu0 %v2105
        %2125 = vmatprep.subr.bf16.mxu0 0
        %2126 = vmatpush1.bf16.msra.mxu0 %v2106
        %2127 = vmatprep.subr.bf16.mxu0 0
        %2128 = vmatpush1.bf16.msra.mxu0 %v2107
        %2129 = vmatprep.subr.bf16.mxu0 0
        %2130 = vmatpush1.bf16.msra.mxu0 %v2108
        %2131 = vmatprep.subr.bf16.mxu0 0
        %2132 = vmatpush1.bf16.msra.mxu0 %v2109
        %2133 = vmatprep.subr.bf16.mxu0 0
        %2134 = vmatpush1.bf16.msra.mxu0 %v2110
        %2135 = vmatprep.subr.bf16.mxu0 0
        %2136 = vmatpush1.bf16.msra.mxu0 0
        %2137 = vmatprep.subr.bf16.mxu0 0
        %2138 = vmatpush1.bf16.msra.mxu0 0
        %2139 = vmatprep.subr.bf16.mxu0 0
        %2140 = vmatpush1.bf16.msra.mxu0 0
        %2141 = vmatprep.subr.bf16.mxu0 0
        %2142 = vmatpush1.bf16.msra.mxu0 0
        %2143 = vmatprep.subr.bf16.mxu0 0
        %2144 = vmatpush1.bf16.msra.mxu0 0
        %2145 = vmatprep.subr.bf16.mxu0 0
        %2146 = vmatpush1.bf16.msra.mxu0 0
        %2147 = vmatprep.subr.bf16.mxu0 0
        %2148 = vmatpush1.bf16.msra.mxu0 0
        %2149 = vmatprep.subr.bf16.mxu0 0
        %2150 = vmatpush1.bf16.msra.mxu0 0
        %2151 = vmatprep.mubr.bf16.mxu0 0
        %2152 = vmatmul.mubr.bf16.gmra.mrb[0].mxu0 %v2047
        %v2153 = vpop.f32.mrb[0].mxu0
        %v2154 = vadd.f32 %v2069, %v2153
        %v2155 = vpop.f32.mrb[0].mxu0
        %v2156 = vpop.f32.mrb[0].mxu0
        %v2157 = vadd.f32 %v2069, %v2156
        %v2158 = vpop.f32.mrb[0].mxu0
        %2159 = vdwg.mxu0
        %v2160 = vadd.f32 %v618, %v2154
        %v2161 = vadd.f32 %v619, %v2157
        %v2162 = vld [vmem:[#allocation14] sm:$0x1]
        %v2163 = vld [vmem:[#allocation16] sm:$0x1]
        %2164 = vadd.xlane.f32.xlu0 %v2160
        %v2165 = vpop.xlane.xlu0 %2164
        %2166 = vadd.xlane.f32.xlu0 %v2161
        %v2167 = vpop.xlane.xlu0 %2166
        %v2168 = vmul.f32 %v2165, %v626
        %v2169 = vmul.f32 %v2167, %v626
        %v2170 = vsub.f32 %v2160, %v2168
        %v2171 = vsub.f32 %v2161, %v2169
        %v2172 = vmul.f32 %v2170, %v2170
        %v2173 = vmul.f32 %v2171, %v2171
        %2174 = vadd.xlane.f32.xlu0 %v2172
        %v2175 = vpop.xlane.xlu0 %2174
        %2176 = vadd.xlane.f32.xlu0 %v2173
        %v2177 = vpop.xlane.xlu0 %2176
        %v2178 = vmul.f32 %v2175, %v626
        %v2179 = vmul.f32 %v2177, %v626
        %v2180 = vadd.f32 %v2178, 1e-06
        %v2181 = vadd.f32 %v2179, 1e-06
        %v2182 = vrsqrt.pop %v2180
        %v2183 = vrsqrt.pop %v2181
        %v2184 = vmul.f32 %v2170, %v2182
        %v2185 = vmul.f32 %v2171, %v2183
        %v2187 = vlaneseq
        %v2188 = vshrl.u32 %v2187, 7
        %v2189 = vsub.s32 0, %v2188
        %v2190 = vrot.slane %v2162, %v2189
        %v2192 = vmul.f32 %v2184, %v2190
        %v2193 = vmul.f32 %v2185, %v2190
        %v2195 = vlaneseq
        %v2196 = vshrl.u32 %v2195, 7
        %v2197 = vsub.s32 0, %v2196
        %v2198 = vrot.slane %v2163, %v2197
        %v2200 = vadd.f32 %v2192, %v2198
        %v2201 = vadd.f32 %v2193, %v2198
        %v2202 = vpack.c.bf16 %v2201, %v2200
        %v2203 = vld [vmem:[#allocation17] sm:$0xff]
        %v2204 = vld [vmem:[#allocation17 + $0x8] sm:$0xff]
        %v2205 = vld [vmem:[#allocation17 + $0x10] sm:$0xff]
        %v2206 = vld [vmem:[#allocation17 + $0x18] sm:$0xff]
        %v2207 = vld [vmem:[#allocation17 + $0x20] sm:$0xff]
        %v2208 = vld [vmem:[#allocation17 + $0x28] sm:$0xff]
        %v2209 = vld [vmem:[#allocation17 + $0x30] sm:$0xff]
        %v2210 = vld [vmem:[#allocation17 + $0x38] sm:$0xff]
        %v2211 = vld [vmem:[#allocation17 + $0x40] sm:$0xff]
        %v2212 = vld [vmem:[#allocation17 + $0x48] sm:$0xff]
        %v2213 = vld [vmem:[#allocation17 + $0x50] sm:$0xff]
        %v2214 = vld [vmem:[#allocation17 + $0x58] sm:$0xff]
        %v2215 = vld [vmem:[#allocation17 + $0x60] sm:$0xff]
        %v2216 = vld [vmem:[#allocation17 + $0x68] sm:$0xff]
        %v2217 = vld [vmem:[#allocation17 + $0x70] sm:$0xff]
        %v2218 = vld [vmem:[#allocation17 + $0x78] sm:$0xff]
        %v2219 = vld [vmem:[#allocation17 + $0x80] sm:$0xff]
        %v2220 = vld [vmem:[#allocation17 + $0x88] sm:$0xff]
        %v2221 = vld [vmem:[#allocation17 + $0x90] sm:$0xff]
        %v2222 = vld [vmem:[#allocation17 + $0x98] sm:$0xff]
        %v2223 = vld [vmem:[#allocation17 + $0xa0] sm:$0xff]
        %v2224 = vld [vmem:[#allocation17 + $0xa8] sm:$0xff]
        %v2225 = vld [vmem:[#allocation17 + $0xb0] sm:$0xff]
        %v2226 = vld [vmem:[#allocation17 + $0xb8] sm:$0xff]
        %v2227 = vld [vmem:[#allocation17 + $0xc0] sm:$0xff]
        %v2228 = vld [vmem:[#allocation17 + $0xc8] sm:$0xff]
        %v2229 = vld [vmem:[#allocation17 + $0xd0] sm:$0xff]
        %v2230 = vld [vmem:[#allocation17 + $0xd8] sm:$0xff]
        %v2231 = vld [vmem:[#allocation17 + $0xe0] sm:$0xff]
        %v2232 = vld [vmem:[#allocation17 + $0xe8] sm:$0xff]
        %v2233 = vld [vmem:[#allocation17 + $0xf0] sm:$0xff]
        %v2234 = vld [vmem:[#allocation17 + $0xf8] sm:$0xff]
        %v2235 = vld [vmem:[#allocation19] sm:$0xf]
        %v2237 = vlaneseq
        %v2238 = vshrl.u32 %v2237, 7
        %v2239 = vsub.s32 0, %v2238
        %v2240 = vrot.slane %v2235, %v2239
        %v2241 = vlaneseq
        %v2242 = vshrl.u32 %v2241, 7
        %v2243 = vsub.s32 1, %v2242
        %v2244 = vrot.slane %v2235, %v2243
        %v2245 = vlaneseq
        %v2246 = vshrl.u32 %v2245, 7
        %v2247 = vsub.s32 2, %v2246
        %v2248 = vrot.slane %v2235, %v2247
        %v2249 = vlaneseq
        %v2250 = vshrl.u32 %v2249, 7
        %v2251 = vsub.s32 3, %v2250
        %v2252 = vrot.slane %v2235, %v2251
        %v2289 = vunpack.c.l.b16 %v2203
        %v2290 = vunpack.c.h.b16 %v2203
        %v2291 = vunpack.c.l.b16 %v2204
        %v2292 = vunpack.c.h.b16 %v2204
        %v2293 = vunpack.c.l.b16 %v2205
        %v2294 = vunpack.c.h.b16 %v2205
        %v2295 = vunpack.c.l.b16 %v2206
        %v2296 = vunpack.c.h.b16 %v2206
        %v2297 = vunpack.c.l.b16 %v2207
        %v2298 = vunpack.c.h.b16 %v2207
        %v2299 = vunpack.c.l.b16 %v2208
        %v2300 = vunpack.c.h.b16 %v2208
        %v2301 = vunpack.c.l.b16 %v2209
        %v2302 = vunpack.c.h.b16 %v2209
        %v2303 = vunpack.c.l.b16 %v2210
        %v2304 = vunpack.c.h.b16 %v2210
        %v2305 = vunpack.c.l.b16 %v2211
        %v2306 = vunpack.c.h.b16 %v2211
        %v2307 = vunpack.c.l.b16 %v2212
        %v2308 = vunpack.c.h.b16 %v2212
        %v2309 = vunpack.c.l.b16 %v2213
        %v2310 = vunpack.c.h.b16 %v2213
        %v2311 = vunpack.c.l.b16 %v2214
        %v2312 = vunpack.c.h.b16 %v2214
        %v2313 = vunpack.c.l.b16 %v2215
        %v2314 = vunpack.c.h.b16 %v2215
        %v2315 = vunpack.c.l.b16 %v2216
        %v2316 = vunpack.c.h.b16 %v2216
        %v2317 = vunpack.c.l.b16 %v2217
        %v2318 = vunpack.c.h.b16 %v2217
        %v2319 = vunpack.c.l.b16 %v2218
        %v2320 = vunpack.c.h.b16 %v2218
        %v2321 = vunpack.c.l.b16 %v2219
        %v2322 = vunpack.c.h.b16 %v2219
        %v2323 = vunpack.c.l.b16 %v2220
        %v2324 = vunpack.c.h.b16 %v2220
        %v2325 = vunpack.c.l.b16 %v2221
        %v2326 = vunpack.c.h.b16 %v2221
        %v2327 = vunpack.c.l.b16 %v2222
        %v2328 = vunpack.c.h.b16 %v2222
        %v2329 = vunpack.c.l.b16 %v2223
        %v2330 = vunpack.c.h.b16 %v2223
        %v2331 = vunpack.c.l.b16 %v2224
        %v2332 = vunpack.c.h.b16 %v2224
        %v2333 = vunpack.c.l.b16 %v2225
        %v2334 = vunpack.c.h.b16 %v2225
        %v2335 = vunpack.c.l.b16 %v2226
        %v2336 = vunpack.c.h.b16 %v2226
        %v2337 = vunpack.c.l.b16 %v2227
        %v2338 = vunpack.c.h.b16 %v2227
        %v2339 = vunpack.c.l.b16 %v2228
        %v2340 = vunpack.c.h.b16 %v2228
        %v2341 = vunpack.c.l.b16 %v2229
        %v2342 = vunpack.c.h.b16 %v2229
        %v2343 = vunpack.c.l.b16 %v2230
        %v2344 = vunpack.c.h.b16 %v2230
        %v2345 = vunpack.c.l.b16 %v2231
        %v2346 = vunpack.c.h.b16 %v2231
        %v2347 = vunpack.c.l.b16 %v2232
        %v2348 = vunpack.c.h.b16 %v2232
        %v2349 = vunpack.c.l.b16 %v2233
        %v2350 = vunpack.c.h.b16 %v2233
        %v2351 = vunpack.c.l.b16 %v2234
        %v2352 = vunpack.c.h.b16 %v2234
        %v2353 = vpack.c.b16 %v2293, %v2289
        %v2354 = vpack.c.b16 %v2294, %v2290
        %v2355 = vpack.c.b16 %v2295, %v2291
        %v2356 = vpack.c.b16 %v2296, %v2292
        %v2357 = vpack.c.b16 %v2301, %v2297
        %v2358 = vpack.c.b16 %v2302, %v2298
        %v2359 = vpack.c.b16 %v2303, %v2299
        %v2360 = vpack.c.b16 %v2304, %v2300
        %v2361 = vpack.c.b16 %v2309, %v2305
        %v2362 = vpack.c.b16 %v2310, %v2306
        %v2363 = vpack.c.b16 %v2311, %v2307
        %v2364 = vpack.c.b16 %v2312, %v2308
        %v2365 = vpack.c.b16 %v2317, %v2313
        %v2366 = vpack.c.b16 %v2318, %v2314
        %v2367 = vpack.c.b16 %v2319, %v2315
        %v2368 = vpack.c.b16 %v2320, %v2316
        %v2369 = vpack.c.b16 %v2325, %v2321
        %v2370 = vpack.c.b16 %v2326, %v2322
        %v2371 = vpack.c.b16 %v2327, %v2323
        %v2372 = vpack.c.b16 %v2328, %v2324
        %v2373 = vpack.c.b16 %v2333, %v2329
        %v2374 = vpack.c.b16 %v2334, %v2330
        %v2375 = vpack.c.b16 %v2335, %v2331
        %v2376 = vpack.c.b16 %v2336, %v2332
        %v2377 = vpack.c.b16 %v2341, %v2337
        %v2378 = vpack.c.b16 %v2342, %v2338
        %v2379 = vpack.c.b16 %v2343, %v2339
        %v2380 = vpack.c.b16 %v2344, %v2340
        %v2381 = vpack.c.b16 %v2349, %v2345
        %v2382 = vpack.c.b16 %v2350, %v2346
        %v2383 = vpack.c.b16 %v2351, %v2347
        %v2384 = vpack.c.b16 %v2352, %v2348
        %2417 = vmatprep.subr.bf16.mxu0 %v2354
        %2418 = vmatpush1.bf16.msra.mxu0 %v2353
        %2419 = vmatprep.subr.bf16.mxu0 %v2358
        %2420 = vmatpush1.bf16.msra.mxu0 %v2357
        %2421 = vmatprep.subr.bf16.mxu0 %v2362
        %2422 = vmatpush1.bf16.msra.mxu0 %v2361
        %2423 = vmatprep.subr.bf16.mxu0 %v2366
        %2424 = vmatpush1.bf16.msra.mxu0 %v2365
        %2425 = vmatprep.subr.bf16.mxu0 %v2370
        %2426 = vmatpush1.bf16.msra.mxu0 %v2369
        %2427 = vmatprep.subr.bf16.mxu0 %v2374
        %2428 = vmatpush1.bf16.msra.mxu0 %v2373
        %2429 = vmatprep.subr.bf16.mxu0 %v2378
        %2430 = vmatpush1.bf16.msra.mxu0 %v2377
        %2431 = vmatprep.subr.bf16.mxu0 %v2382
        %2432 = vmatpush1.bf16.msra.mxu0 %v2381
        %2433 = vmatprep.subr.bf16.mxu0 0
        %2434 = vmatpush1.bf16.msra.mxu0 0
        %2435 = vmatprep.subr.bf16.mxu0 0
        %2436 = vmatpush1.bf16.msra.mxu0 0
        %2437 = vmatprep.subr.bf16.mxu0 0
        %2438 = vmatpush1.bf16.msra.mxu0 0
        %2439 = vmatprep.subr.bf16.mxu0 0
        %2440 = vmatpush1.bf16.msra.mxu0 0
        %2441 = vmatprep.subr.bf16.mxu0 0
        %2442 = vmatpush1.bf16.msra.mxu0 0
        %2443 = vmatprep.subr.bf16.mxu0 0
        %2444 = vmatpush1.bf16.msra.mxu0 0
        %2445 = vmatprep.subr.bf16.mxu0 0
        %2446 = vmatpush1.bf16.msra.mxu0 0
        %2447 = vmatprep.subr.bf16.mxu0 0
        %2448 = vmatpush1.bf16.msra.mxu0 0
        %2449 = vmatprep.mubr.bf16.mxu0 0
        %2450 = vmatmul.mubr.bf16.gmra.mrb[0].mxu0 %v2202
        %v2451 = vpop.f32.mrb[0].mxu0
        %v2452 = vadd.f32 %v2240, %v2451
        %v2453 = vpop.f32.mrb[0].mxu0
        %v2454 = vadd.f32 %v2244, %v2453
        %v2455 = vpop.f32.mrb[0].mxu0
        %v2456 = vadd.f32 %v2240, %v2455
        %v2457 = vpop.f32.mrb[0].mxu0
        %v2458 = vadd.f32 %v2244, %v2457
        %2459 = vdwg.mxu0
        %2460 = vmatprep.subr.bf16.mxu0 %v2356
        %2461 = vmatpush1.bf16.msra.mxu0 %v2355
        %2462 = vmatprep.subr.bf16.mxu0 %v2360
        %2463 = vmatpush1.bf16.msra.mxu0 %v2359
        %2464 = vmatprep.subr.bf16.mxu0 %v2364
        %2465 = vmatpush1.bf16.msra.mxu0 %v2363
        %2466 = vmatprep.subr.bf16.mxu0 %v2368
        %2467 = vmatpush1.bf16.msra.mxu0 %v2367
        %2468 = vmatprep.subr.bf16.mxu0 %v2372
        %2469 = vmatpush1.bf16.msra.mxu0 %v2371
        %2470 = vmatprep.subr.bf16.mxu0 %v2376
        %2471 = vmatpush1.bf16.msra.mxu0 %v2375
        %2472 = vmatprep.subr.bf16.mxu0 %v2380
        %2473 = vmatpush1.bf16.msra.mxu0 %v2379
        %2474 = vmatprep.subr.bf16.mxu0 %v2384
        %2475 = vmatpush1.bf16.msra.mxu0 %v2383
        %2476 = vmatprep.subr.bf16.mxu0 0
        %2477 = vmatpush1.bf16.msra.mxu0 0
        %2478 = vmatprep.subr.bf16.mxu0 0
        %2479 = vmatpush1.bf16.msra.mxu0 0
        %2480 = vmatprep.subr.bf16.mxu0 0
        %2481 = vmatpush1.bf16.msra.mxu0 0
        %2482 = vmatprep.subr.bf16.mxu0 0
        %2483 = vmatpush1.bf16.msra.mxu0 0
        %2484 = vmatprep.subr.bf16.mxu0 0
        %2485 = vmatpush1.bf16.msra.mxu0 0
        %2486 = vmatprep.subr.bf16.mxu0 0
        %2487 = vmatpush1.bf16.msra.mxu0 0
        %2488 = vmatprep.subr.bf16.mxu0 0
        %2489 = vmatpush1.bf16.msra.mxu0 0
        %2490 = vmatprep.subr.bf16.mxu0 0
        %2491 = vmatpush1.bf16.msra.mxu0 0
        %2492 = vmatprep.mubr.bf16.mxu0 0
        %2493 = vmatmul.mubr.bf16.gmra.mrb[0].mxu0 %v2202
        %v2494 = vpop.f32.mrb[0].mxu0
        %v2495 = vadd.f32 %v2248, %v2494
        %v2496 = vpop.f32.mrb[0].mxu0
        %v2497 = vadd.f32 %v2252, %v2496
        %v2498 = vpop.f32.mrb[0].mxu0
        %v2499 = vadd.f32 %v2248, %v2498
        %v2500 = vpop.f32.mrb[0].mxu0
        %v2501 = vadd.f32 %v2252, %v2500
        %2502 = vdwg.mxu0
        %v2503 = vmul.f32 %v2452, 0.5
        %v2504 = vmul.f32 %v2454, 0.5
        %v2505 = vmul.f32 %v2495, 0.5
        %v2506 = vmul.f32 %v2497, 0.5
        %v2507 = vmul.f32 %v2456, 0.5
        %v2508 = vmul.f32 %v2458, 0.5
        %v2509 = vmul.f32 %v2499, 0.5
        %v2510 = vmul.f32 %v2501, 0.5
        %v2511 = vmul.f32 %v2452, 0.044715
        %v2512 = vmul.f32 %v2454, 0.044715
        %v2513 = vmul.f32 %v2495, 0.044715
        %v2514 = vmul.f32 %v2497, 0.044715
        %v2515 = vmul.f32 %v2456, 0.044715
        %v2516 = vmul.f32 %v2458, 0.044715
        %v2517 = vmul.f32 %v2499, 0.044715
        %v2518 = vmul.f32 %v2501, 0.044715
        %v2519 = vmul.f32 %v2511, %v2452
        %v2520 = vmul.f32 %v2512, %v2454
        %v2521 = vmul.f32 %v2513, %v2495
        %v2522 = vmul.f32 %v2514, %v2497
        %v2523 = vmul.f32 %v2515, %v2456
        %v2524 = vmul.f32 %v2516, %v2458
        %v2525 = vmul.f32 %v2517, %v2499
        %v2526 = vmul.f32 %v2518, %v2501
        %v2527 = vmul.f32 %v2519, %v2452
        %v2528 = vmul.f32 %v2520, %v2454
        %v2529 = vmul.f32 %v2521, %v2495
        %v2530 = vmul.f32 %v2522, %v2497
        %v2531 = vmul.f32 %v2523, %v2456
        %v2532 = vmul.f32 %v2524, %v2458
        %v2533 = vmul.f32 %v2525, %v2499
        %v2534 = vmul.f32 %v2526, %v2501
        %v2535 = vadd.f32 %v2452, %v2527
        %v2536 = vadd.f32 %v2454, %v2528
        %v2537 = vadd.f32 %v2495, %v2529
        %v2538 = vadd.f32 %v2497, %v2530
        %v2539 = vadd.f32 %v2456, %v2531
        %v2540 = vadd.f32 %v2458, %v2532
        %v2541 = vadd.f32 %v2499, %v2533
        %v2542 = vadd.f32 %v2501, %v2534
        %v2543 = vmul.f32 %v2535, 0.7978846
        %v2544 = vmul.f32 %v2536, 0.7978846
        %v2545 = vmul.f32 %v2537, 0.7978846
        %v2546 = vmul.f32 %v2538, 0.7978846
        %v2547 = vmul.f32 %v2539, 0.7978846
        %v2548 = vmul.f32 %v2540, 0.7978846
        %v2549 = vmul.f32 %v2541, 0.7978846
        %v2550 = vmul.f32 %v2542, 0.7978846
        %v2551 = vtanh.pop %v2543
        %v2552 = vtanh.pop %v2544
        %v2553 = vtanh.pop %v2545
        %v2554 = vtanh.pop %v2546
        %v2555 = vtanh.pop %v2547
        %v2556 = vtanh.pop %v2548
        %v2557 = vtanh.pop %v2549
        %v2558 = vtanh.pop %v2550
        %v2559 = vadd.f32 %v2551, 1.0
        %v2560 = vadd.f32 %v2552, 1.0
        %v2561 = vadd.f32 %v2553, 1.0
        %v2562 = vadd.f32 %v2554, 1.0
        %v2563 = vadd.f32 %v2555, 1.0
        %v2564 = vadd.f32 %v2556, 1.0
        %v2565 = vadd.f32 %v2557, 1.0
        %v2566 = vadd.f32 %v2558, 1.0
        %v2567 = vmul.f32 %v2503, %v2559
        %v2568 = vmul.f32 %v2504, %v2560
        %v2569 = vmul.f32 %v2505, %v2561
        %v2570 = vmul.f32 %v2506, %v2562
        %v2571 = vmul.f32 %v2507, %v2563
        %v2572 = vmul.f32 %v2508, %v2564
        %v2573 = vmul.f32 %v2509, %v2565
        %v2574 = vmul.f32 %v2510, %v2566
        %v2575 = vpack.c.bf16 %v2571, %v2567
        %v2576 = vpack.c.bf16 %v2572, %v2568
        %v2577 = vpack.c.bf16 %v2573, %v2569
        %v2578 = vpack.c.bf16 %v2574, %v2570
        %v2579 = vld [vmem:[#allocation20] sm:$0xf]
        %v2580 = vld [vmem:[#allocation20 + $0x4] sm:$0xf]
        %v2581 = vld [vmem:[#allocation20 + $0x8] sm:$0xf]
        %v2582 = vld [vmem:[#allocation20 + $0xc] sm:$0xf]
        %v2583 = vld [vmem:[#allocation20 + $0x10] sm:$0xf]
        %v2584 = vld [vmem:[#allocation20 + $0x14] sm:$0xf]
        %v2585 = vld [vmem:[#allocation20 + $0x18] sm:$0xf]
        %v2586 = vld [vmem:[#allocation20 + $0x1c] sm:$0xf]
        %v2587 = vld [vmem:[#allocation20 + $0x20] sm:$0xf]
        %v2588 = vld [vmem:[#allocation20 + $0x24] sm:$0xf]
        %v2589 = vld [vmem:[#allocation20 + $0x28] sm:$0xf]
        %v2590 = vld [vmem:[#allocation20 + $0x2c] sm:$0xf]
        %v2591 = vld [vmem:[#allocation20 + $0x30] sm:$0xf]
        %v2592 = vld [vmem:[#allocation20 + $0x34] sm:$0xf]
        %v2593 = vld [vmem:[#allocation20 + $0x38] sm:$0xf]
        %v2594 = vld [vmem:[#allocation20 + $0x3c] sm:$0xf]
        %v2595 = vld [vmem:[#allocation20 + $0x40] sm:$0xf]
        %v2596 = vld [vmem:[#allocation20 + $0x44] sm:$0xf]
        %v2597 = vld [vmem:[#allocation20 + $0x48] sm:$0xf]
        %v2598 = vld [vmem:[#allocation20 + $0x4c] sm:$0xf]
        %v2599 = vld [vmem:[#allocation20 + $0x50] sm:$0xf]
        %v2600 = vld [vmem:[#allocation20 + $0x54] sm:$0xf]
        %v2601 = vld [vmem:[#allocation20 + $0x58] sm:$0xf]
        %v2602 = vld [vmem:[#allocation20 + $0x5c] sm:$0xf]
        %v2603 = vld [vmem:[#allocation20 + $0x60] sm:$0xf]
        %v2604 = vld [vmem:[#allocation20 + $0x64] sm:$0xf]
        %v2605 = vld [vmem:[#allocation20 + $0x68] sm:$0xf]
        %v2606 = vld [vmem:[#allocation20 + $0x6c] sm:$0xf]
        %v2607 = vld [vmem:[#allocation20 + $0x70] sm:$0xf]
        %v2608 = vld [vmem:[#allocation20 + $0x74] sm:$0xf]
        %v2609 = vld [vmem:[#allocation20 + $0x78] sm:$0xf]
        %v2610 = vld [vmem:[#allocation20 + $0x7c] sm:$0xf]
        %v2611 = vld [vmem:[#allocation20 + $0x80] sm:$0xf]
        %v2612 = vld [vmem:[#allocation20 + $0x84] sm:$0xf]
        %v2613 = vld [vmem:[#allocation20 + $0x88] sm:$0xf]
        %v2614 = vld [vmem:[#allocation20 + $0x8c] sm:$0xf]
        %v2615 = vld [vmem:[#allocation20 + $0x90] sm:$0xf]
        %v2616 = vld [vmem:[#allocation20 + $0x94] sm:$0xf]
        %v2617 = vld [vmem:[#allocation20 + $0x98] sm:$0xf]
        %v2618 = vld [vmem:[#allocation20 + $0x9c] sm:$0xf]
        %v2619 = vld [vmem:[#allocation20 + $0xa0] sm:$0xf]
        %v2620 = vld [vmem:[#allocation20 + $0xa4] sm:$0xf]
        %v2621 = vld [vmem:[#allocation20 + $0xa8] sm:$0xf]
        %v2622 = vld [vmem:[#allocation20 + $0xac] sm:$0xf]
        %v2623 = vld [vmem:[#allocation20 + $0xb0] sm:$0xf]
        %v2624 = vld [vmem:[#allocation20 + $0xb4] sm:$0xf]
        %v2625 = vld [vmem:[#allocation20 + $0xb8] sm:$0xf]
        %v2626 = vld [vmem:[#allocation20 + $0xbc] sm:$0xf]
        %v2627 = vld [vmem:[#allocation20 + $0xc0] sm:$0xf]
        %v2628 = vld [vmem:[#allocation20 + $0xc4] sm:$0xf]
        %v2629 = vld [vmem:[#allocation20 + $0xc8] sm:$0xf]
        %v2630 = vld [vmem:[#allocation20 + $0xcc] sm:$0xf]
        %v2631 = vld [vmem:[#allocation20 + $0xd0] sm:$0xf]
        %v2632 = vld [vmem:[#allocation20 + $0xd4] sm:$0xf]
        %v2633 = vld [vmem:[#allocation20 + $0xd8] sm:$0xf]
        %v2634 = vld [vmem:[#allocation20 + $0xdc] sm:$0xf]
        %v2635 = vld [vmem:[#allocation20 + $0xe0] sm:$0xf]
        %v2636 = vld [vmem:[#allocation20 + $0xe4] sm:$0xf]
        %v2637 = vld [vmem:[#allocation20 + $0xe8] sm:$0xf]
        %v2638 = vld [vmem:[#allocation20 + $0xec] sm:$0xf]
        %v2639 = vld [vmem:[#allocation20 + $0xf0] sm:$0xf]
        %v2640 = vld [vmem:[#allocation20 + $0xf4] sm:$0xf]
        %v2641 = vld [vmem:[#allocation20 + $0xf8] sm:$0xf]
        %v2642 = vld [vmem:[#allocation20 + $0xfc] sm:$0xf]
        %v2643 = vld [vmem:[#allocation22] sm:$0x1]
        %v2645 = vlaneseq
        %v2646 = vshrl.u32 %v2645, 7
        %v2647 = vsub.s32 0, %v2646
        %v2648 = vrot.slane %v2643, %v2647
        %v2714 = vunpack.c.l.b16 %v2579
        %v2715 = vunpack.c.l.b16 %v2580
        %v2716 = vunpack.c.l.b16 %v2581
        %v2717 = vunpack.c.l.b16 %v2582
        %v2718 = vunpack.c.l.b16 %v2583
        %v2719 = vunpack.c.l.b16 %v2584
        %v2720 = vunpack.c.l.b16 %v2585
        %v2721 = vunpack.c.l.b16 %v2586
        %v2722 = vunpack.c.l.b16 %v2587
        %v2723 = vunpack.c.l.b16 %v2588
        %v2724 = vunpack.c.l.b16 %v2589
        %v2725 = vunpack.c.l.b16 %v2590
        %v2726 = vunpack.c.l.b16 %v2591
        %v2727 = vunpack.c.l.b16 %v2592
        %v2728 = vunpack.c.l.b16 %v2593
        %v2729 = vunpack.c.l.b16 %v2594
        %v2730 = vunpack.c.l.b16 %v2595
        %v2731 = vunpack.c.l.b16 %v2596
        %v2732 = vunpack.c.l.b16 %v2597
        %v2733 = vunpack.c.l.b16 %v2598
        %v2734 = vunpack.c.l.b16 %v2599
        %v2735 = vunpack.c.l.b16 %v2600
        %v2736 = vunpack.c.l.b16 %v2601
        %v2737 = vunpack.c.l.b16 %v2602
        %v2738 = vunpack.c.l.b16 %v2603
        %v2739 = vunpack.c.l.b16 %v2604
        %v2740 = vunpack.c.l.b16 %v2605
        %v2741 = vunpack.c.l.b16 %v2606
        %v2742 = vunpack.c.l.b16 %v2607
        %v2743 = vunpack.c.l.b16 %v2608
        %v2744 = vunpack.c.l.b16 %v2609
        %v2745 = vunpack.c.l.b16 %v2610
        %v2746 = vunpack.c.l.b16 %v2611
        %v2747 = vunpack.c.l.b16 %v2612
        %v2748 = vunpack.c.l.b16 %v2613
        %v2749 = vunpack.c.l.b16 %v2614
        %v2750 = vunpack.c.l.b16 %v2615
        %v2751 = vunpack.c.l.b16 %v2616
        %v2752 = vunpack.c.l.b16 %v2617
        %v2753 = vunpack.c.l.b16 %v2618
        %v2754 = vunpack.c.l.b16 %v2619
        %v2755 = vunpack.c.l.b16 %v2620
        %v2756 = vunpack.c.l.b16 %v2621
        %v2757 = vunpack.c.l.b16 %v2622
        %v2758 = vunpack.c.l.b16 %v2623
        %v2759 = vunpack.c.l.b16 %v2624
        %v2760 = vunpack.c.l.b16 %v2625
        %v2761 = vunpack.c.l.b16 %v2626
        %v2762 = vunpack.c.l.b16 %v2627
        %v2763 = vunpack.c.l.b16 %v2628
        %v2764 = vunpack.c.l.b16 %v2629
        %v2765 = vunpack.c.l.b16 %v2630
        %v2766 = vunpack.c.l.b16 %v2631
        %v2767 = vunpack.c.l.b16 %v2632
        %v2768 = vunpack.c.l.b16 %v2633
        %v2769 = vunpack.c.l.b16 %v2634
        %v2770 = vunpack.c.l.b16 %v2635
        %v2771 = vunpack.c.l.b16 %v2636
        %v2772 = vunpack.c.l.b16 %v2637
        %v2773 = vunpack.c.l.b16 %v2638
        %v2774 = vunpack.c.l.b16 %v2639
        %v2775 = vunpack.c.l.b16 %v2640
        %v2776 = vunpack.c.l.b16 %v2641
        %v2777 = vunpack.c.l.b16 %v2642
        %v2778 = vpack.c.b16 %v2715, %v2714
        %v2779 = vpack.c.b16 %v2717, %v2716
        %v2780 = vpack.c.b16 %v2719, %v2718
        %v2781 = vpack.c.b16 %v2721, %v2720
        %v2782 = vpack.c.b16 %v2723, %v2722
        %v2783 = vpack.c.b16 %v2725, %v2724
        %v2784 = vpack.c.b16 %v2727, %v2726
        %v2785 = vpack.c.b16 %v2729, %v2728
        %v2786 = vpack.c.b16 %v2731, %v2730
        %v2787 = vpack.c.b16 %v2733, %v2732
        %v2788 = vpack.c.b16 %v2735, %v2734
        %v2789 = vpack.c.b16 %v2737, %v2736
        %v2790 = vpack.c.b16 %v2739, %v2738
        %v2791 = vpack.c.b16 %v2741, %v2740
        %v2792 = vpack.c.b16 %v2743, %v2742
        %v2793 = vpack.c.b16 %v2745, %v2744
        %v2794 = vpack.c.b16 %v2747, %v2746
        %v2795 = vpack.c.b16 %v2749, %v2748
        %v2796 = vpack.c.b16 %v2751, %v2750
        %v2797 = vpack.c.b16 %v2753, %v2752
        %v2798 = vpack.c.b16 %v2755, %v2754
        %v2799 = vpack.c.b16 %v2757, %v2756
        %v2800 = vpack.c.b16 %v2759, %v2758
        %v2801 = vpack.c.b16 %v2761, %v2760
        %v2802 = vpack.c.b16 %v2763, %v2762
        %v2803 = vpack.c.b16 %v2765, %v2764
        %v2804 = vpack.c.b16 %v2767, %v2766
        %v2805 = vpack.c.b16 %v2769, %v2768
        %v2806 = vpack.c.b16 %v2771, %v2770
        %v2807 = vpack.c.b16 %v2773, %v2772
        %v2808 = vpack.c.b16 %v2775, %v2774
        %v2809 = vpack.c.b16 %v2777, %v2776
        %2842 = vmatprep.subr.bf16.mxu0 0
        %2843 = vmatpush1.bf16.msra.mxu0 %v2778
        %2844 = vmatprep.subr.bf16.mxu0 0
        %2845 = vmatpush1.bf16.msra.mxu0 %v2779
        %2846 = vmatprep.subr.bf16.mxu0 0
        %2847 = vmatpush1.bf16.msra.mxu0 %v2780
        %2848 = vmatprep.subr.bf16.mxu0 0
        %2849 = vmatpush1.bf16.msra.mxu0 %v2781
        %2850 = vmatprep.subr.bf16.mxu0 0
        %2851 = vmatpush1.bf16.msra.mxu0 %v2782
        %2852 = vmatprep.subr.bf16.mxu0 0
        %2853 = vmatpush1.bf16.msra.mxu0 %v2783
        %2854 = vmatprep.subr.bf16.mxu0 0
        %2855 = vmatpush1.bf16.msra.mxu0 %v2784
        %2856 = vmatprep.subr.bf16.mxu0 0
        %2857 = vmatpush1.bf16.msra.mxu0 %v2785
        %2858 = vmatprep.subr.bf16.mxu0 0
        %2859 = vmatpush1.bf16.msra.mxu0 %v2786
        %2860 = vmatprep.subr.bf16.mxu0 0
        %2861 = vmatpush1.bf16.msra.mxu0 %v2787
        %2862 = vmatprep.subr.bf16.mxu0 0
        %2863 = vmatpush1.bf16.msra.mxu0 %v2788
        %2864 = vmatprep.subr.bf16.mxu0 0
        %2865 = vmatpush1.bf16.msra.mxu0 %v2789
        %2866 = vmatprep.subr.bf16.mxu0 0
        %2867 = vmatpush1.bf16.msra.mxu0 %v2790
        %2868 = vmatprep.subr.bf16.mxu0 0
        %2869 = vmatpush1.bf16.msra.mxu0 %v2791
        %2870 = vmatprep.subr.bf16.mxu0 0
        %2871 = vmatpush1.bf16.msra.mxu0 %v2792
        %2872 = vmatprep.subr.bf16.mxu0 0
        %2873 = vmatpush1.bf16.msra.mxu0 %v2793
        %2874 = vmatprep.mubr.bf16.mxu0 %v2576
        %2875 = vmatmul.mubr.bf16.gmra.mrb[0].mxu0 %v2575
        %v2876 = vpop.f32.mrb[0].mxu0
        %v2877 = vadd.f32 %v2648, %v2876
        %v2878 = vpop.f32.mrb[0].mxu0
        %v2879 = vpop.f32.mrb[0].mxu0
        %v2880 = vadd.f32 %v2648, %v2879
        %v2881 = vpop.f32.mrb[0].mxu0
        %2882 = vdwg.mxu0
        %2883 = vmatprep.subr.bf16.mxu0 0
        %2884 = vmatpush1.bf16.msra.mxu0 %v2794
        %2885 = vmatprep.subr.bf16.mxu0 0
        %2886 = vmatpush1.bf16.msra.mxu0 %v2795
        %2887 = vmatprep.subr.bf16.mxu0 0
        %2888 = vmatpush1.bf16.msra.mxu0 %v2796
        %2889 = vmatprep.subr.bf16.mxu0 0
        %2890 = vmatpush1.bf16.msra.mxu0 %v2797
        %2891 = vmatprep.subr.bf16.mxu0 0
        %2892 = vmatpush1.bf16.msra.mxu0 %v2798
        %2893 = vmatprep.subr.bf16.mxu0 0
        %2894 = vmatpush1.bf16.msra.mxu0 %v2799
        %2895 = vmatprep.subr.bf16.mxu0 0
        %2896 = vmatpush1.bf16.msra.mxu0 %v2800
        %2897 = vmatprep.subr.bf16.mxu0 0
        %2898 = vmatpush1.bf16.msra.mxu0 %v2801
        %2899 = vmatprep.subr.bf16.mxu0 0
        %2900 = vmatpush1.bf16.msra.mxu0 %v2802
        %2901 = vmatprep.subr.bf16.mxu0 0
        %2902 = vmatpush1.bf16.msra.mxu0 %v2803
        %2903 = vmatprep.subr.bf16.mxu0 0
        %2904 = vmatpush1.bf16.msra.mxu0 %v2804
        %2905 = vmatprep.subr.bf16.mxu0 0
        %2906 = vmatpush1.bf16.msra.mxu0 %v2805
        %2907 = vmatprep.subr.bf16.mxu0 0
        %2908 = vmatpush1.bf16.msra.mxu0 %v2806
        %2909 = vmatprep.subr.bf16.mxu0 0
        %2910 = vmatpush1.bf16.msra.mxu0 %v2807
        %2911 = vmatprep.subr.bf16.mxu0 0
        %2912 = vmatpush1.bf16.msra.mxu0 %v2808
        %2913 = vmatprep.subr.bf16.mxu0 0
        %2914 = vmatpush1.bf16.msra.mxu0 %v2809
        %2915 = vmatprep.mubr.bf16.mxu0 %v2578
        %2916 = vmatmul.mubr.bf16.gmra.mrb[0].mxu0 %v2577
        %v2917 = vpop.f32.mrb[0].mxu0
        %v2918 = vadd.f32 %v2877, %v2917
        %v2919 = vpop.f32.mrb[0].mxu0
        %v2920 = vpop.f32.mrb[0].mxu0
        %v2921 = vadd.f32 %v2880, %v2920
        %v2922 = vpop.f32.mrb[0].mxu0
        %2923 = vdwg.mxu0
        %v2924 = vadd.f32 %v2160, %v2918
        %v2925 = vadd.f32 %v2161, %v2921
        %2926 = vst [vmem:[%s616] sm:$0xff] %v2924
        %2927 = vst [vmem:[%s616 + $0x8] sm:$0xff] %v2925
        %s2928 = sand.u32 %s322, 1
        %s2929 = scalar_lea.sflag [#allocation4], %s2928
        %s2930 = sand.u32 %s322, 1
        %s2931 = smul.addr %s2930, 16
        %s2932 = scalar_lea.vmem [#allocation23], %s2931
        // Predicated region
        $region125: #{tpu_custom_call.1} parent=71 // pred_check
          %p2933 = pneg %p332
        $region126: #{tpu_custom_call.1} parent=71 // pred_check_branch
          %2935 = sbr.rel (%p2933) target = $region128
        $region127: #{tpu_custom_call.1} parent=71 // pred_region
          %s2937 = ssub.s32 256, 256
          %2938 = vsyncadd %s2929, %s2937
          %s2939 = smul.addr %s36, 2
          %s2940 = smul.addr %s2939, 128
          %s2941 = scalar_lea.hbm %s13, %s2940
          %s2942 = sshll.u32 %s2932, 4
          %s2943 = int_to_ptr.vmem [resolvable:$true] %s2942
          %2948 = dma.vmem_to_hbm [thread:$0]  %s2943, 256, %s2941, %s2929, 128, 128, 8
        $region128: #{tpu_custom_call.1} parent=71 // pred_fallthru
          _
      $region72: #{tpu_custom_call.1} parent=5 // pred_fallthru
        _
      %p2949 = scmp.le.s32.totalorder 2, %s31
      // Predicated region
      $region129: #{tpu_custom_call.1} parent=5 // pred_check
        %p2950 = pneg %p2949
      $region130: #{tpu_custom_call.1} parent=5 // pred_check_branch
        %2952 = sbr.rel (%p2950) target = $region132
      $region131: #{tpu_custom_call.1} parent=5 // pred_region
        %s2953 = ssub.s32 %s31, 2
        // Predicated region
        $region133: #{tpu_custom_call.1} parent=131 // pred_check
          %p2954 = pneg %p338
        $region134: #{tpu_custom_call.1} parent=131 // pred_check_branch
          %2956 = sbr.rel (%p2954) target = $region136
        $region135: #{tpu_custom_call.1} parent=131 // pred_region
          %s2957 = sand.u32 %s323, 1
          %s2958 = scalar_lea.sflag [#allocation4], %s2957
          %s2959 = sand.u32 %s323, 1
          %s2960 = smul.addr %s2959, 16
          %s2961 = scalar_lea.vmem [#allocation23], %s2960
          %2962 = dma.done %s2958, 256
        $region136: #{tpu_custom_call.1} parent=131 // pred_fallthru
          _
      $region132: #{tpu_custom_call.1} parent=5 // pred_fallthru
        _
    $region6: #{tpu_custom_call.1} parent=1 // loop_footer
      %s35 = sadd.s32 1, %s31
    $region7: #{tpu_custom_call.1} parent=1 // loop_footer_branch
      %30 = sbr.rel target = $region3
    $region8: #{tpu_custom_call.1} parent=1 // loop_exit
      _
    %2963 = vsyncpa [#allocation3], 1
    %s2964 = scalar_lea.sflag [#allocation3], 1
    %2965 = vsyncpa %s2964, 1
    %2966 = vsyncpa [#allocation6], 1
    %2967 = vsyncpa [#allocation9], 1
    %2968 = vsyncpa [#allocation12], 1
    %2969 = vsyncpa [#allocation15], 1
    %2970 = vsyncpa [#allocation18], 1
    %2971 = vsyncpa [#allocation21], 1
    %2972 = vsyncpa [#allocation4], 1
    %s2973 = scalar_lea.sflag [#allocation4], 1
    %2974 = vsyncpa %s2973, 1

</llo_original>
